<compile_context>
chip_gen: v7x
topology: tpu7x:2x2x1
jax: 0.10.0
libtpu: 0.0.40
codegen_flags: <defaults>
</compile_context>

<pallas_src>
import jax
import jax.numpy as jnp
from jax.experimental import pallas as pl
from jax.experimental.pallas import tpu as pltpu

# ---------------- config (small, deterministic) ----------------
B = 2           # batch
N = 8           # n_patches (seq)
D = 32          # hidden_size
H = 4           # num_attention_heads
DH = D // H     # head dim
SCALE = DH ** -0.5
P = 128         # lane-dense (multiple-of-128) output width
ATTN_DROPOUT = 0.0  # TODO(synk): F.dropout in training mode not implemented (eval-mode identity)


def siglip_attention_kernel(x_ref, wqkv_ref, bqkv_ref, wproj_ref, bproj_ref,
                            out_ref, attn_ref):
    """Single invocation, whole problem resident in VMEM.

    x_ref:     (B*N, D)
    wqkv_ref:  (D, 3D)     pre-transposed qkv weight
    bqkv_ref:  (1, 3D)
    wproj_ref: (D, P)      pre-transposed proj weight, zero-padded to 128 lanes
    bproj_ref: (1, P)      proj bias, zero-padded to 128 lanes
    out_ref:   (B*N, P)    lanes [0, D) meaningful
    attn_ref:  (B*N, P)    lanes [h*N, h*N+N) hold head h's probabilities
    """
    x = x_ref[...]                                                   # (BN, D)

    # One QKV projection for the whole batch (MXU).
    qkv = jnp.dot(x, wqkv_ref[...],
                  preferred_element_type=jnp.float32) + bqkv_ref[...]  # (BN, 3D)

    attn_blocks = []
    out_acc = jnp.zeros((B * N, P), dtype=jnp.float32)

    # Static loop over heads (H=4). Per head: batched (over B) einsums, no
    # explicit k transpose, no per-head stores, no output concatenate.
    for h in range(H):
        qh = qkv[:, 0 * D + h * DH: 0 * D + (h + 1) * DH].reshape(B, N, DH)
        kh = qkv[:, 1 * D + h * DH: 1 * D + (h + 1) * DH].reshape(B, N, DH)
        vh = qkv[:, 2 * D + h * DH: 2 * D + (h + 1) * DH].reshape(B, N, DH)

        # scores: contract on d of both operands (no kh.T / XLU transpose)
        s = jnp.einsum('bid,bjd->bij', qh, kh,
                       preferred_element_type=jnp.float32) * SCALE   # (B, N, N)

        # numerically-stable softmax; reciprocal-multiply instead of divide
        m = jnp.max(s, axis=-1, keepdims=True)
        e = jnp.exp(s - m)
        inv = pl.reciprocal(jnp.sum(e, axis=-1, keepdims=True), approx=False)
        p = e * inv                                                  # (B, N, N)

        attn_blocks.append(p.reshape(B * N, N))                      # (BN, N)

        oh = jnp.einsum('bij,bjd->bid', p, vh,
                        preferred_element_type=jnp.float32)          # (B, N, DH)
        oh = oh.reshape(B * N, DH)                                   # (BN, DH)

        # 'b h n d -> b n (h d)' followed by proj  ==  sum_h oh @ Wproj_t[rows of h]
        out_acc = out_acc + jnp.dot(oh, wproj_ref[h * DH:(h + 1) * DH, :],
                                    preferred_element_type=jnp.float32)

    # Single lane-dense (128-wide) store for the projected output.
    out_ref[...] = (out_acc + bproj_ref[...]).astype(out_ref.dtype)

    # Single lane-dense store for the attention probabilities of all heads.
    pad = jnp.zeros((B * N, P - H * N), dtype=jnp.float32)
    attn_ref[...] = jnp.concatenate(attn_blocks + [pad], axis=-1)


@jax.jit
def siglip_attention(hidden_states, wqkv, bqkv, wproj, bproj):
    """hidden_states: (B, N, D) float32.
    wqkv: (3D, D), bqkv: (3D,), wproj: (D, D), bproj: (D,)  -- PyTorch Linear layout.
    """
    b, n, d = hidden_states.shape
    assert (b, n, d) == (B, N, D)

    # Fuse batch & sequence; pre-transpose weights (PyTorch Linear is x @ W.T + b).
    x2d = hidden_states.reshape(B * N, D)
    wqkv_t = wqkv.T                                   # (D, 3D)
    bqkv2d = bqkv.reshape(1, 3 * D)
    # Zero-pad the projection to 128 output lanes -> unmasked full-vreg store.
    wproj_t = jnp.zeros((D, P), jnp.float32).at[:, :D].set(wproj.T)
    bproj2d = jnp.zeros((1, P), jnp.float32).at[:, :D].set(bproj)

    out_pad, attn_pad = pl.pallas_call(
        siglip_attention_kernel,
        out_shape=(
            jax.ShapeDtypeStruct((B * N, P), jnp.float32),   # out (lane-dense)
            jax.ShapeDtypeStruct((B * N, P), jnp.float32),   # attn (lane-dense)
        ),
        in_specs=[pl.BlockSpec(memory_space=pltpu.MemorySpace.VMEM)] * 5,
        out_specs=(pl.BlockSpec(memory_space=pltpu.MemorySpace.VMEM),
                   pl.BlockSpec(memory_space=pltpu.MemorySpace.VMEM)),
    )(x2d, wqkv_t, bqkv2d, wproj_t, bproj2d)

    # Strip padding / restore torch layouts (plain XLA, outside the kernel).
    out = out_pad[:, :D].reshape(B, N, D)
    attn = attn_pad[:, :H * N].reshape(B, N, H, N).transpose(0, 2, 1, 3)  # (B,H,N,N)
    return out, attn


def siglip_attention_ref(x, wqkv, bqkv, wproj, bproj):
    """Pure-JAX reference mirroring the PyTorch forward."""
    qkv = x @ wqkv.T + bqkv                               # (B, N, 3D)
    q, k, v = jnp.split(qkv, 3, axis=-1)

    def to_heads(t):
        return t.reshape(B, N, H, DH).transpose(0, 2, 1, 3)  # (B, H, N, DH)

    q, k, v = map(to_heads, (q, k, v))
    dots = jnp.einsum('bhid,bhjd->bhij', q, k) * SCALE
    attn = jax.nn.softmax(dots, axis=-1)
    out = jnp.einsum('bhij,bhjd->bhid', attn, v)
    out = out.transpose(0, 2, 1, 3).reshape(B, N, D)
    out = out @ wproj.T + bproj
    return out, attn


if __name__ == "__main__":
    key = jax.random.PRNGKey(0)
    k_x, k_wq, k_bq, k_wp, k_bp = jax.random.split(key, 5)

    x = jax.random.normal(k_x, (B, N, D), dtype=jnp.float32)
    # deterministic parameter init (shapes from nn.Linear in __init__)
    wqkv = jax.random.normal(k_wq, (3 * D, D), dtype=jnp.float32) * 0.02
    bqkv = jax.random.normal(k_bq, (3 * D,), dtype=jnp.float32) * 0.02
    wproj = jax.random.normal(k_wp, (D, D), dtype=jnp.float32) * 0.02
    bproj = jax.random.normal(k_bp, (D,), dtype=jnp.float32) * 0.02

    out, attn = siglip_attention(x, wqkv, bqkv, wproj, bproj)
    jax.block_until_ready((out, attn))

    out_r, attn_r = siglip_attention_ref(x, wqkv, bqkv, wproj, bproj)
    assert out.shape == (B, N, D) and attn.shape == (B, H, N, N)
    assert jnp.allclose(out, out_r, atol=1e-4, rtol=1e-4)
    assert jnp.allclose(attn, attn_r, atol=1e-5, rtol=1e-5)

    print("KERNEL_OK")
</pallas_src>

<mosaic_0001>
module attributes {stable_mosaic.version = 11 : i64} {
  func.func @siglip_attention_kernel(%arg0: memref<16x32xf32, #tpu.memory_space<vmem>>, %arg1: memref<32x96xf32, #tpu.memory_space<vmem>>, %arg2: memref<1x96xf32, #tpu.memory_space<vmem>>, %arg3: memref<32x128xf32, #tpu.memory_space<vmem>>, %arg4: memref<1x128xf32, #tpu.memory_space<vmem>>, %arg5: memref<16x128xf32, #tpu.memory_space<vmem>>, %arg6: memref<16x128xf32, #tpu.memory_space<vmem>>) attributes {dimension_semantics = [], scalar_prefetch = 0 : i64, scratch_operands = 0 : i64, tpu.core_type = #tpu.core_type<tc>} {
    %c0 = arith.constant 0 : index
    %c0_0 = arith.constant 0 : index
    %0 = vector.load %arg0[%c0, %c0_0] : memref<16x32xf32, #tpu.memory_space<vmem>>, vector<16x32xf32>
    %c0_1 = arith.constant 0 : index
    %c0_2 = arith.constant 0 : index
    %1 = vector.load %arg1[%c0_1, %c0_2] : memref<32x96xf32, #tpu.memory_space<vmem>>, vector<32x96xf32>
    %cst = arith.constant dense<0.000000e+00> : vector<16x96xf32>
    %2 = tpu.matmul %0, %1, %cst {dimension_numbers = #tpu.dot_dimension_numbers<[1], [0], [0], [1], [0, 0, 1, 1], [], []>} : vector<16x32xf32>, vector<32x96xf32>, vector<16x96xf32> -> vector<16x96xf32>
    %c0_3 = arith.constant 0 : index
    %c0_4 = arith.constant 0 : index
    %3 = vector.load %arg2[%c0_3, %c0_4] : memref<1x96xf32, #tpu.memory_space<vmem>>, vector<1x96xf32>
    %4 = vector.broadcast %3 : vector<1x96xf32> to vector<16x96xf32>
    %5 = arith.addf %2, %4 : vector<16x96xf32>
    %cst_5 = arith.constant 0.000000e+00 : f32
    %6 = vector.broadcast %cst_5 : f32 to vector<16x128xf32>
    %7 = vector.extract_strided_slice %5 {offsets = [0, 0], sizes = [16, 8], strides = [1, 1]} : vector<16x96xf32> to vector<16x8xf32>
    %8 = vector.shape_cast %7 : vector<16x8xf32> to vector<2x8x8xf32>
    %9 = vector.extract_strided_slice %5 {offsets = [0, 32], sizes = [16, 8], strides = [1, 1]} : vector<16x96xf32> to vector<16x8xf32>
    %10 = vector.shape_cast %9 : vector<16x8xf32> to vector<2x8x8xf32>
    %11 = vector.extract_strided_slice %5 {offsets = [0, 64], sizes = [16, 8], strides = [1, 1]} : vector<16x96xf32> to vector<16x8xf32>
    %12 = vector.shape_cast %11 : vector<16x8xf32> to vector<2x8x8xf32>
    "tpu.trace_start"() <{level = 10 : i32, message = "bid,bjd->bij"}> : () -> ()
    %cst_6 = arith.constant dense<0.000000e+00> : vector<2x8x8xf32>
    %13 = tpu.matmul %8, %10, %cst_6 {dimension_numbers = #tpu.dot_dimension_numbers<[2], [2], [1], [1], [0, 0, 0, 1, 1, 1], [0], [0]>} : vector<2x8x8xf32>, vector<2x8x8xf32>, vector<2x8x8xf32> -> vector<2x8x8xf32>
    "tpu.trace_stop"() : () -> ()
    %cst_7 = arith.constant 0.353553385 : f32
    %14 = vector.broadcast %cst_7 : f32 to vector<2x8x8xf32>
    %15 = arith.mulf %13, %14 : vector<2x8x8xf32>
    %cst_8 = arith.constant dense<0xFF800000> : vector<2x8xf32>
    %16 = vector.multi_reduction <maximumf>, %15, %cst_8 [2] : vector<2x8x8xf32> to vector<2x8xf32>
    %17 = vector.shape_cast %16 : vector<2x8xf32> to vector<2x8x1xf32>
    %18 = vector.broadcast %17 : vector<2x8x1xf32> to vector<2x8x8xf32>
    %19 = arith.subf %15, %18 : vector<2x8x8xf32>
    %20 = math.exp %19 : vector<2x8x8xf32>
    %cst_9 = arith.constant dense<0.000000e+00> : vector<2x8xf32>
    %21 = vector.multi_reduction <add>, %20, %cst_9 [2] : vector<2x8x8xf32> to vector<2x8xf32>
    %22 = vector.shape_cast %21 : vector<2x8xf32> to vector<2x8x1xf32>
    %23 = tpu.reciprocal %22 : vector<2x8x1xf32> -> vector<2x8x1xf32>
    %24 = vector.broadcast %23 : vector<2x8x1xf32> to vector<2x8x8xf32>
    %25 = arith.mulf %20, %24 : vector<2x8x8xf32>
    %26 = vector.shape_cast %25 : vector<2x8x8xf32> to vector<16x8xf32>
    "tpu.trace_start"() <{level = 10 : i32, message = "bij,bjd->bid"}> : () -> ()
    %cst_10 = arith.constant dense<0.000000e+00> : vector<2x8x8xf32>
    %27 = tpu.matmul %25, %12, %cst_10 {dimension_numbers = #tpu.dot_dimension_numbers<[2], [1], [1], [2], [0, 0, 0, 1, 1, 2], [0], [0]>} : vector<2x8x8xf32>, vector<2x8x8xf32>, vector<2x8x8xf32> -> vector<2x8x8xf32>
    "tpu.trace_stop"() : () -> ()
    %28 = vector.shape_cast %27 : vector<2x8x8xf32> to vector<16x8xf32>
    %c0_11 = arith.constant 0 : index
    %c0_12 = arith.constant 0 : index
    %29 = vector.load %arg3[%c0_11, %c0_12] : memref<32x128xf32, #tpu.memory_space<vmem>>, vector<8x128xf32>
    %cst_13 = arith.constant dense<0.000000e+00> : vector<16x128xf32>
    %30 = tpu.matmul %28, %29, %cst_13 {dimension_numbers = #tpu.dot_dimension_numbers<[1], [0], [0], [1], [0, 0, 1, 1], [], []>} : vector<16x8xf32>, vector<8x128xf32>, vector<16x128xf32> -> vector<16x128xf32>
    %31 = arith.addf %6, %30 : vector<16x128xf32>
    %32 = vector.extract_strided_slice %5 {offsets = [0, 8], sizes = [16, 8], strides = [1, 1]} : vector<16x96xf32> to vector<16x8xf32>
    %33 = vector.shape_cast %32 : vector<16x8xf32> to vector<2x8x8xf32>
    %34 = vector.extract_strided_slice %5 {offsets = [0, 40], sizes = [16, 8], strides = [1, 1]} : vector<16x96xf32> to vector<16x8xf32>
    %35 = vector.shape_cast %34 : vector<16x8xf32> to vector<2x8x8xf32>
    %36 = vector.extract_strided_slice %5 {offsets = [0, 72], sizes = [16, 8], strides = [1, 1]} : vector<16x96xf32> to vector<16x8xf32>
    %37 = vector.shape_cast %36 : vector<16x8xf32> to vector<2x8x8xf32>
    "tpu.trace_start"() <{level = 10 : i32, message = "bid,bjd->bij"}> : () -> ()
    %cst_14 = arith.constant dense<0.000000e+00> : vector<2x8x8xf32>
    %38 = tpu.matmul %33, %35, %cst_14 {dimension_numbers = #tpu.dot_dimension_numbers<[2], [2], [1], [1], [0, 0, 0, 1, 1, 1], [0], [0]>} : vector<2x8x8xf32>, vector<2x8x8xf32>, vector<2x8x8xf32> -> vector<2x8x8xf32>
    "tpu.trace_stop"() : () -> ()
    %cst_15 = arith.constant 0.353553385 : f32
    %39 = vector.broadcast %cst_15 : f32 to vector<2x8x8xf32>
    %40 = arith.mulf %38, %39 : vector<2x8x8xf32>
    %cst_16 = arith.constant dense<0xFF800000> : vector<2x8xf32>
    %41 = vector.multi_reduction <maximumf>, %40, %cst_16 [2] : vector<2x8x8xf32> to vector<2x8xf32>
    %42 = vector.shape_cast %41 : vector<2x8xf32> to vector<2x8x1xf32>
    %43 = vector.broadcast %42 : vector<2x8x1xf32> to vector<2x8x8xf32>
    %44 = arith.subf %40, %43 : vector<2x8x8xf32>
    %45 = math.exp %44 : vector<2x8x8xf32>
    %cst_17 = arith.constant dense<0.000000e+00> : vector<2x8xf32>
    %46 = vector.multi_reduction <add>, %45, %cst_17 [2] : vector<2x8x8xf32> to vector<2x8xf32>
    %47 = vector.shape_cast %46 : vector<2x8xf32> to vector<2x8x1xf32>
    %48 = tpu.reciprocal %47 : vector<2x8x1xf32> -> vector<2x8x1xf32>
    %49 = vector.broadcast %48 : vector<2x8x1xf32> to vector<2x8x8xf32>
    %50 = arith.mulf %45, %49 : vector<2x8x8xf32>
    %51 = vector.shape_cast %50 : vector<2x8x8xf32> to vector<16x8xf32>
    "tpu.trace_start"() <{level = 10 : i32, message = "bij,bjd->bid"}> : () -> ()
    %cst_18 = arith.constant dense<0.000000e+00> : vector<2x8x8xf32>
    %52 = tpu.matmul %50, %37, %cst_18 {dimension_numbers = #tpu.dot_dimension_numbers<[2], [1], [1], [2], [0, 0, 0, 1, 1, 2], [0], [0]>} : vector<2x8x8xf32>, vector<2x8x8xf32>, vector<2x8x8xf32> -> vector<2x8x8xf32>
    "tpu.trace_stop"() : () -> ()
    %53 = vector.shape_cast %52 : vector<2x8x8xf32> to vector<16x8xf32>
    %c8 = arith.constant 8 : index
    %c0_19 = arith.constant 0 : index
    %54 = vector.load %arg3[%c8, %c0_19] : memref<32x128xf32, #tpu.memory_space<vmem>>, vector<8x128xf32>
    %cst_20 = arith.constant dense<0.000000e+00> : vector<16x128xf32>
    %55 = tpu.matmul %53, %54, %cst_20 {dimension_numbers = #tpu.dot_dimension_numbers<[1], [0], [0], [1], [0, 0, 1, 1], [], []>} : vector<16x8xf32>, vector<8x128xf32>, vector<16x128xf32> -> vector<16x128xf32>
    %56 = arith.addf %31, %55 : vector<16x128xf32>
    %57 = vector.extract_strided_slice %5 {offsets = [0, 16], sizes = [16, 8], strides = [1, 1]} : vector<16x96xf32> to vector<16x8xf32>
    %58 = vector.shape_cast %57 : vector<16x8xf32> to vector<2x8x8xf32>
    %59 = vector.extract_strided_slice %5 {offsets = [0, 48], sizes = [16, 8], strides = [1, 1]} : vector<16x96xf32> to vector<16x8xf32>
    %60 = vector.shape_cast %59 : vector<16x8xf32> to vector<2x8x8xf32>
    %61 = vector.extract_strided_slice %5 {offsets = [0, 80], sizes = [16, 8], strides = [1, 1]} : vector<16x96xf32> to vector<16x8xf32>
    %62 = vector.shape_cast %61 : vector<16x8xf32> to vector<2x8x8xf32>
    "tpu.trace_start"() <{level = 10 : i32, message = "bid,bjd->bij"}> : () -> ()
    %cst_21 = arith.constant dense<0.000000e+00> : vector<2x8x8xf32>
    %63 = tpu.matmul %58, %60, %cst_21 {dimension_numbers = #tpu.dot_dimension_numbers<[2], [2], [1], [1], [0, 0, 0, 1, 1, 1], [0], [0]>} : vector<2x8x8xf32>, vector<2x8x8xf32>, vector<2x8x8xf32> -> vector<2x8x8xf32>
    "tpu.trace_stop"() : () -> ()
    %cst_22 = arith.constant 0.353553385 : f32
    %64 = vector.broadcast %cst_22 : f32 to vector<2x8x8xf32>
    %65 = arith.mulf %63, %64 : vector<2x8x8xf32>
    %cst_23 = arith.constant dense<0xFF800000> : vector<2x8xf32>
    %66 = vector.multi_reduction <maximumf>, %65, %cst_23 [2] : vector<2x8x8xf32> to vector<2x8xf32>
    %67 = vector.shape_cast %66 : vector<2x8xf32> to vector<2x8x1xf32>
    %68 = vector.broadcast %67 : vector<2x8x1xf32> to vector<2x8x8xf32>
    %69 = arith.subf %65, %68 : vector<2x8x8xf32>
    %70 = math.exp %69 : vector<2x8x8xf32>
    %cst_24 = arith.constant dense<0.000000e+00> : vector<2x8xf32>
    %71 = vector.multi_reduction <add>, %70, %cst_24 [2] : vector<2x8x8xf32> to vector<2x8xf32>
    %72 = vector.shape_cast %71 : vector<2x8xf32> to vector<2x8x1xf32>
    %73 = tpu.reciprocal %72 : vector<2x8x1xf32> -> vector<2x8x1xf32>
    %74 = vector.broadcast %73 : vector<2x8x1xf32> to vector<2x8x8xf32>
    %75 = arith.mulf %70, %74 : vector<2x8x8xf32>
    %76 = vector.shape_cast %75 : vector<2x8x8xf32> to vector<16x8xf32>
    "tpu.trace_start"() <{level = 10 : i32, message = "bij,bjd->bid"}> : () -> ()
    %cst_25 = arith.constant dense<0.000000e+00> : vector<2x8x8xf32>
    %77 = tpu.matmul %75, %62, %cst_25 {dimension_numbers = #tpu.dot_dimension_numbers<[2], [1], [1], [2], [0, 0, 0, 1, 1, 2], [0], [0]>} : vector<2x8x8xf32>, vector<2x8x8xf32>, vector<2x8x8xf32> -> vector<2x8x8xf32>
    "tpu.trace_stop"() : () -> ()
    %78 = vector.shape_cast %77 : vector<2x8x8xf32> to vector<16x8xf32>
    %c16 = arith.constant 16 : index
    %c0_26 = arith.constant 0 : index
    %79 = vector.load %arg3[%c16, %c0_26] : memref<32x128xf32, #tpu.memory_space<vmem>>, vector<8x128xf32>
    %cst_27 = arith.constant dense<0.000000e+00> : vector<16x128xf32>
    %80 = tpu.matmul %78, %79, %cst_27 {dimension_numbers = #tpu.dot_dimension_numbers<[1], [0], [0], [1], [0, 0, 1, 1], [], []>} : vector<16x8xf32>, vector<8x128xf32>, vector<16x128xf32> -> vector<16x128xf32>
    %81 = arith.addf %56, %80 : vector<16x128xf32>
    %82 = vector.extract_strided_slice %5 {offsets = [0, 24], sizes = [16, 8], strides = [1, 1]} : vector<16x96xf32> to vector<16x8xf32>
    %83 = vector.shape_cast %82 : vector<16x8xf32> to vector<2x8x8xf32>
    %84 = vector.extract_strided_slice %5 {offsets = [0, 56], sizes = [16, 8], strides = [1, 1]} : vector<16x96xf32> to vector<16x8xf32>
    %85 = vector.shape_cast %84 : vector<16x8xf32> to vector<2x8x8xf32>
    %86 = vector.extract_strided_slice %5 {offsets = [0, 88], sizes = [16, 8], strides = [1, 1]} : vector<16x96xf32> to vector<16x8xf32>
    %87 = vector.shape_cast %86 : vector<16x8xf32> to vector<2x8x8xf32>
    "tpu.trace_start"() <{level = 10 : i32, message = "bid,bjd->bij"}> : () -> ()
    %cst_28 = arith.constant dense<0.000000e+00> : vector<2x8x8xf32>
    %88 = tpu.matmul %83, %85, %cst_28 {dimension_numbers = #tpu.dot_dimension_numbers<[2], [2], [1], [1], [0, 0, 0, 1, 1, 1], [0], [0]>} : vector<2x8x8xf32>, vector<2x8x8xf32>, vector<2x8x8xf32> -> vector<2x8x8xf32>
    "tpu.trace_stop"() : () -> ()
    %cst_29 = arith.constant 0.353553385 : f32
    %89 = vector.broadcast %cst_29 : f32 to vector<2x8x8xf32>
    %90 = arith.mulf %88, %89 : vector<2x8x8xf32>
    %cst_30 = arith.constant dense<0xFF800000> : vector<2x8xf32>
    %91 = vector.multi_reduction <maximumf>, %90, %cst_30 [2] : vector<2x8x8xf32> to vector<2x8xf32>
    %92 = vector.shape_cast %91 : vector<2x8xf32> to vector<2x8x1xf32>
    %93 = vector.broadcast %92 : vector<2x8x1xf32> to vector<2x8x8xf32>
    %94 = arith.subf %90, %93 : vector<2x8x8xf32>
    %95 = math.exp %94 : vector<2x8x8xf32>
    %cst_31 = arith.constant dense<0.000000e+00> : vector<2x8xf32>
    %96 = vector.multi_reduction <add>, %95, %cst_31 [2] : vector<2x8x8xf32> to vector<2x8xf32>
    %97 = vector.shape_cast %96 : vector<2x8xf32> to vector<2x8x1xf32>
    %98 = tpu.reciprocal %97 : vector<2x8x1xf32> -> vector<2x8x1xf32>
    %99 = vector.broadcast %98 : vector<2x8x1xf32> to vector<2x8x8xf32>
    %100 = arith.mulf %95, %99 : vector<2x8x8xf32>
    %101 = vector.shape_cast %100 : vector<2x8x8xf32> to vector<16x8xf32>
    "tpu.trace_start"() <{level = 10 : i32, message = "bij,bjd->bid"}> : () -> ()
    %cst_32 = arith.constant dense<0.000000e+00> : vector<2x8x8xf32>
    %102 = tpu.matmul %100, %87, %cst_32 {dimension_numbers = #tpu.dot_dimension_numbers<[2], [1], [1], [2], [0, 0, 0, 1, 1, 2], [0], [0]>} : vector<2x8x8xf32>, vector<2x8x8xf32>, vector<2x8x8xf32> -> vector<2x8x8xf32>
    "tpu.trace_stop"() : () -> ()
    %103 = vector.shape_cast %102 : vector<2x8x8xf32> to vector<16x8xf32>
    %c24 = arith.constant 24 : index
    %c0_33 = arith.constant 0 : index
    %104 = vector.load %arg3[%c24, %c0_33] : memref<32x128xf32, #tpu.memory_space<vmem>>, vector<8x128xf32>
    %cst_34 = arith.constant dense<0.000000e+00> : vector<16x128xf32>
    %105 = tpu.matmul %103, %104, %cst_34 {dimension_numbers = #tpu.dot_dimension_numbers<[1], [0], [0], [1], [0, 0, 1, 1], [], []>} : vector<16x8xf32>, vector<8x128xf32>, vector<16x128xf32> -> vector<16x128xf32>
    %106 = arith.addf %81, %105 : vector<16x128xf32>
    %c0_35 = arith.constant 0 : index
    %c0_36 = arith.constant 0 : index
    %107 = vector.load %arg4[%c0_35, %c0_36] : memref<1x128xf32, #tpu.memory_space<vmem>>, vector<1x128xf32>
    %108 = vector.broadcast %107 : vector<1x128xf32> to vector<16x128xf32>
    %109 = arith.addf %106, %108 : vector<16x128xf32>
    %c0_37 = arith.constant 0 : index
    %c0_38 = arith.constant 0 : index
    %110 = vector.load %arg5[%c0_37, %c0_38] : memref<16x128xf32, #tpu.memory_space<vmem>>, vector<16x128xf32>
    tpu.vector_store %arg5[%c0_37, %c0_38], %109 {strides = array<i32>} : memref<16x128xf32, #tpu.memory_space<vmem>>, vector<16x128xf32>,
    %cst_39 = arith.constant 0.000000e+00 : f32
    %111 = vector.broadcast %cst_39 : f32 to vector<16x96xf32>
    %112 = tpu.concatenate %26, %51, %76, %101, %111 in 1 : vector<16x8xf32>, vector<16x8xf32>, vector<16x8xf32>, vector<16x8xf32>, vector<16x96xf32> -> vector<16x128xf32>
    %c0_40 = arith.constant 0 : index
    %c0_41 = arith.constant 0 : index
    %113 = vector.load %arg6[%c0_40, %c0_41] : memref<16x128xf32, #tpu.memory_space<vmem>>, vector<16x128xf32>
    tpu.vector_store %arg6[%c0_40, %c0_41], %112 {strides = array<i32>} : memref<16x128xf32, #tpu.memory_space<vmem>>, vector<16x128xf32>,
    return
  }
}

</mosaic_0001>

<llo_original>
// kernel: siglip_attention.1
$region0: #{siglip_attention.1}
  #allocation0 [shape = 'u32[]', space=smem, size = 0x4, offset = 0x4, fixed_abs, tag = 'smem constant byte address 0x4 - core index']
  #allocation1 [shape = 'u32[144,128]{1,0:T(1,128)}', space=vmem, size = 0x12000, scoped, tag = 'internal scratch']
  %s0 = inlined_call_operand.vmem [shape: f32[16,32], index: 0, kind: input, shape index: {}]
  %s1 = inlined_call_operand.vmem [shape: f32[32,96], index: 1, kind: input, shape index: {}]
  %s2 = inlined_call_operand.vmem [shape: f32[1,96], index: 2, kind: input, shape index: {}]
  %s3 = inlined_call_operand.vmem [shape: f32[32,128], index: 3, kind: input, shape index: {}]
  %s4 = inlined_call_operand.vmem [shape: f32[1,128], index: 4, kind: input, shape index: {}]
  %s5 = inlined_call_operand.vmem [shape: f32[16,128], index: 5, kind: output, shape index: {0}]
  %s6 = inlined_call_operand.vmem [shape: f32[16,128], index: 6, kind: output, shape index: {1}]
  %7 = xla_tuple %s5, %s6
  %s8 = sld [smem:[#allocation0]]
  $region38: #{siglip_attention.1} parent=0
    _
  %s10 = ssub.s32 1, %s8
  %s11 = scalar_select 0, %s10, %s8
  // Predicated region
  $region2: #{siglip_attention.1} parent=0 // pred_check
    _
  $region3: #{siglip_attention.1} parent=0 // pred_check_branch
    %13 = sbr.rel (0) target = $region5
  $region4: #{siglip_attention.1} parent=0 // pred_region
    _
  $region5: #{siglip_attention.1} parent=0 // pred_fallthru
    _
  // Predicated region
  $region6: #{siglip_attention.1} parent=0 // pred_check
    _
  $region7: #{siglip_attention.1} parent=0 // pred_check_branch
    %15 = sbr.rel (0) target = $region9
  $region8: #{siglip_attention.1} parent=0 // pred_region
    _
  $region9: #{siglip_attention.1} parent=0 // pred_fallthru
    _
  // Predicated region
  $region10: #{siglip_attention.1} parent=0 // pred_check
    _
  $region11: #{siglip_attention.1} parent=0 // pred_check_branch
    %17 = sbr.rel (0) target = $region13
  $region12: #{siglip_attention.1} parent=0 // pred_region
    _
  $region13: #{siglip_attention.1} parent=0 // pred_fallthru
    _
  // Predicated region
  $region14: #{siglip_attention.1} parent=0 // pred_check
    _
  $region15: #{siglip_attention.1} parent=0 // pred_check_branch
    %19 = sbr.rel (0) target = $region17
  $region16: #{siglip_attention.1} parent=0 // pred_region
    _
  $region17: #{siglip_attention.1} parent=0 // pred_fallthru
    _
  // Predicated region
  $region18: #{siglip_attention.1} parent=0 // pred_check
    _
  $region19: #{siglip_attention.1} parent=0 // pred_check_branch
    %21 = sbr.rel (0) target = $region21
  $region20: #{siglip_attention.1} parent=0 // pred_region
    _
  $region21: #{siglip_attention.1} parent=0 // pred_fallthru
    _
  %v22 = vld [vmem:[%s0] sm:$0xff]
  %v23 = vld [vmem:[%s0 + $0x8] sm:$0xff]
  %v24 = vld [vmem:[%s1] sm:$0xff]
  %v25 = vld [vmem:[%s1 + $0x8] sm:$0xff]
  %v26 = vld [vmem:[%s1 + $0x10] sm:$0xff]
  %v27 = vld [vmem:[%s1 + $0x18] sm:$0xff]
  %v28 = vld [vmem:[%s2] sm:$0x1]
  %v30 = vlaneseq
  %v31 = vshrl.u32 %v30, 7
  %v32 = vsub.s32 0, %v31
  %v33 = vrot.slane %v28, %v32
  %vm35 = vcmask 261120
  %v37 = vsel %vm35, %v22, 0
  %v40 = vsel %vm35, %v23, 0
  %42 = vmatprep.subr.mxu0 0.0
  %43 = vmatpush1.msra.mxu0 %v24
  %44 = vmatprep.subr.mxu0 0.0
  %45 = vmatpush1.msra.mxu0 %v25
  %46 = vmatprep.subr.mxu0 0.0
  %47 = vmatpush1.msra.mxu0 %v26
  %48 = vmatprep.subr.mxu0 0.0
  %49 = vmatpush1.msra.mxu0 %v27
  %50 = vmatprep.subr.mxu0 0.0
  %51 = vmatpush1.msra.mxu0 0.0
  %52 = vmatprep.subr.mxu0 0.0
  %53 = vmatpush1.msra.mxu0 0.0
  %54 = vmatprep.subr.mxu0 0.0
  %55 = vmatpush1.msra.mxu0 0.0
  %56 = vmatprep.subr.mxu0 0.0
  %57 = vmatpush1.msra.mxu0 0.0
  %58 = vmatprep.subr.mxu0 0.0
  %59 = vmatpush1.msra.mxu0 0.0
  %60 = vmatprep.subr.mxu0 0.0
  %61 = vmatpush1.msra.mxu0 0.0
  %62 = vmatprep.subr.mxu0 0.0
  %63 = vmatpush1.msra.mxu0 0.0
  %64 = vmatprep.subr.mxu0 0.0
  %65 = vmatpush1.msra.mxu0 0.0
  %66 = vmatprep.subr.mxu0 0.0
  %67 = vmatpush1.msra.mxu0 0.0
  %68 = vmatprep.subr.mxu0 0.0
  %69 = vmatpush1.msra.mxu0 0.0
  %70 = vmatprep.subr.mxu0 0.0
  %71 = vmatpush1.msra.mxu0 0.0
  %72 = vmatprep.subr.mxu0 0.0
  %73 = vmatpush1.msra.mxu0 0.0
  %74 = vmatprep.subr.mxu0 0.0
  %75 = vmatpush1.msra.mxu0 0.0
  %76 = vmatprep.subr.mxu0 0.0
  %77 = vmatpush1.msra.mxu0 0.0
  %78 = vmatprep.subr.mxu0 0.0
  %79 = vmatpush1.msra.mxu0 0.0
  %80 = vmatprep.subr.mxu0 0.0
  %81 = vmatpush1.msra.mxu0 0.0
  %82 = vmatprep.subr.mxu0 0.0
  %83 = vmatpush1.msra.mxu0 0.0
  %84 = vmatprep.subr.mxu0 0.0
  %85 = vmatpush1.msra.mxu0 0.0
  %86 = vmatprep.subr.mxu0 0.0
  %87 = vmatpush1.msra.mxu0 0.0
  %88 = vmatprep.subr.mxu0 0.0
  %89 = vmatpush1.msra.mxu0 0.0
  %90 = vmatprep.subr.mxu0 0.0
  %91 = vmatpush1.msra.mxu0 0.0
  %92 = vmatprep.subr.mxu0 0.0
  %93 = vmatpush1.msra.mxu0 0.0
  %94 = vmatprep.subr.mxu0 0.0
  %95 = vmatpush1.msra.mxu0 0.0
  %96 = vmatprep.subr.mxu0 0.0
  %97 = vmatpush1.msra.mxu0 0.0
  %98 = vmatprep.subr.mxu0 0.0
  %99 = vmatpush1.msra.mxu0 0.0
  %100 = vmatprep.subr.mxu0 0.0
  %101 = vmatpush1.msra.mxu0 0.0
  %102 = vmatprep.subr.mxu0 0.0
  %103 = vmatpush1.msra.mxu0 0.0
  %104 = vmatprep.subr.mxu0 0.0
  %105 = vmatpush1.msra.mxu0 0.0
  %106 = vmatprep.mubr.f32.mxu0 0.0
  %107 = vmatmul.mubr.f32.gmra.mrb[0].mxu0 %v37
  %v108 = vpop.f32.mrb[0].mxu0
  %v109 = vadd.f32 %v33, %v108
  %v110 = vpop.f32.mrb[0].mxu0
  %111 = vmatprep.mubr.f32.mxu0 0.0
  %112 = vmatmul.mubr.f32.gmra.mrb[0].mxu0 %v40
  %v113 = vpop.f32.mrb[0].mxu0
  %v114 = vadd.f32 %v33, %v113
  %v115 = vpop.f32.mrb[0].mxu0
  %116 = vdwg.mxu0
  %118 = vrot.lane.b32.xlu0 %v109, 96
  %v119 = vpop.permute.xlu0 %118
  %vm120 = vcmask 64512
  %v121 = vsel %vm120, %v109, 0
  %v123 = vsel %vm120, %v119, 0
  %125 = vmatprep.subr.mxu0 0.0
  %126 = vmatpush1.xpose.msra.mxu0 %v123
  %127 = vmatprep.subr.mxu0 0.0
  %128 = vmatpush1.xpose.msra.mxu0 0.0
  %129 = vmatprep.subr.mxu0 0.0
  %130 = vmatpush1.xpose.msra.mxu0 0.0
  %131 = vmatprep.subr.mxu0 0.0
  %132 = vmatpush1.xpose.msra.mxu0 0.0
  %133 = vmatprep.subr.mxu0 0.0
  %134 = vmatpush1.xpose.msra.mxu0 0.0
  %135 = vmatprep.subr.mxu0 0.0
  %136 = vmatpush1.xpose.msra.mxu0 0.0
  %137 = vmatprep.subr.mxu0 0.0
  %138 = vmatpush1.xpose.msra.mxu0 0.0
  %139 = vmatprep.subr.mxu0 0.0
  %140 = vmatpush1.xpose.msra.mxu0 0.0
  %141 = vmatprep.subr.mxu0 0.0
  %142 = vmatpush1.xpose.msra.mxu0 0.0
  %143 = vmatprep.subr.mxu0 0.0
  %144 = vmatpush1.xpose.msra.mxu0 0.0
  %145 = vmatprep.subr.mxu0 0.0
  %146 = vmatpush1.xpose.msra.mxu0 0.0
  %147 = vmatprep.subr.mxu0 0.0
  %148 = vmatpush1.xpose.msra.mxu0 0.0
  %149 = vmatprep.subr.mxu0 0.0
  %150 = vmatpush1.xpose.msra.mxu0 0.0
  %151 = vmatprep.subr.mxu0 0.0
  %152 = vmatpush1.xpose.msra.mxu0 0.0
  %153 = vmatprep.subr.mxu0 0.0
  %154 = vmatpush1.xpose.msra.mxu0 0.0
  %155 = vmatprep.subr.mxu0 0.0
  %156 = vmatpush1.xpose.msra.mxu0 0.0
  %157 = vmatprep.subr.mxu0 0.0
  %158 = vmatpush1.xpose.msra.mxu0 0.0
  %159 = vmatprep.subr.mxu0 0.0
  %160 = vmatpush1.xpose.msra.mxu0 0.0
  %161 = vmatprep.subr.mxu0 0.0
  %162 = vmatpush1.xpose.msra.mxu0 0.0
  %163 = vmatprep.subr.mxu0 0.0
  %164 = vmatpush1.xpose.msra.mxu0 0.0
  %165 = vmatprep.subr.mxu0 0.0
  %166 = vmatpush1.xpose.msra.mxu0 0.0
  %167 = vmatprep.subr.mxu0 0.0
  %168 = vmatpush1.xpose.msra.mxu0 0.0
  %169 = vmatprep.subr.mxu0 0.0
  %170 = vmatpush1.xpose.msra.mxu0 0.0
  %171 = vmatprep.subr.mxu0 0.0
  %172 = vmatpush1.xpose.msra.mxu0 0.0
  %173 = vmatprep.subr.mxu0 0.0
  %174 = vmatpush1.xpose.msra.mxu0 0.0
  %175 = vmatprep.subr.mxu0 0.0
  %176 = vmatpush1.xpose.msra.mxu0 0.0
  %177 = vmatprep.subr.mxu0 0.0
  %178 = vmatpush1.xpose.msra.mxu0 0.0
  %179 = vmatprep.subr.mxu0 0.0
  %180 = vmatpush1.xpose.msra.mxu0 0.0
  %181 = vmatprep.subr.mxu0 0.0
  %182 = vmatpush1.xpose.msra.mxu0 0.0
  %183 = vmatprep.subr.mxu0 0.0
  %184 = vmatpush1.xpose.msra.mxu0 0.0
  %185 = vmatprep.subr.mxu0 0.0
  %186 = vmatpush1.xpose.msra.mxu0 0.0
  %187 = vmatprep.subr.mxu0 0.0
  %188 = vmatpush1.xpose.msra.mxu0 0.0
  %189 = vmatprep.mubr.f32.mxu0 0.0
  %190 = vmatmul.mubr.f32.gmra.mrb[0].mxu0 %v121
  %v191 = vpop.f32.mrb[0].mxu0
  %v192 = vadd.f32 0.0, %v191
  %v193 = vpop.f32.mrb[0].mxu0
  %194 = vdwg.mxu0
  %196 = vrot.lane.b32.xlu0 %v114, 96
  %v197 = vpop.permute.xlu0 %196
  %v198 = vsel %vm120, %v114, 0
  %v200 = vsel %vm120, %v197, 0
  %202 = vmatprep.subr.mxu0 0.0
  %203 = vmatpush1.xpose.msra.mxu0 %v200
  %204 = vmatprep.subr.mxu0 0.0
  %205 = vmatpush1.xpose.msra.mxu0 0.0
  %206 = vmatprep.subr.mxu0 0.0
  %207 = vmatpush1.xpose.msra.mxu0 0.0
  %208 = vmatprep.subr.mxu0 0.0
  %209 = vmatpush1.xpose.msra.mxu0 0.0
  %210 = vmatprep.subr.mxu0 0.0
  %211 = vmatpush1.xpose.msra.mxu0 0.0
  %212 = vmatprep.subr.mxu0 0.0
  %213 = vmatpush1.xpose.msra.mxu0 0.0
  %214 = vmatprep.subr.mxu0 0.0
  %215 = vmatpush1.xpose.msra.mxu0 0.0
  %216 = vmatprep.subr.mxu0 0.0
  %217 = vmatpush1.xpose.msra.mxu0 0.0
  %218 = vmatprep.subr.mxu0 0.0
  %219 = vmatpush1.xpose.msra.mxu0 0.0
  %220 = vmatprep.subr.mxu0 0.0
  %221 = vmatpush1.xpose.msra.mxu0 0.0
  %222 = vmatprep.subr.mxu0 0.0
  %223 = vmatpush1.xpose.msra.mxu0 0.0
  %224 = vmatprep.subr.mxu0 0.0
  %225 = vmatpush1.xpose.msra.mxu0 0.0
  %226 = vmatprep.subr.mxu0 0.0
  %227 = vmatpush1.xpose.msra.mxu0 0.0
  %228 = vmatprep.subr.mxu0 0.0
  %229 = vmatpush1.xpose.msra.mxu0 0.0
  %230 = vmatprep.subr.mxu0 0.0
  %231 = vmatpush1.xpose.msra.mxu0 0.0
  %232 = vmatprep.subr.mxu0 0.0
  %233 = vmatpush1.xpose.msra.mxu0 0.0
  %234 = vmatprep.subr.mxu0 0.0
  %235 = vmatpush1.xpose.msra.mxu0 0.0
  %236 = vmatprep.subr.mxu0 0.0
  %237 = vmatpush1.xpose.msra.mxu0 0.0
  %238 = vmatprep.subr.mxu0 0.0
  %239 = vmatpush1.xpose.msra.mxu0 0.0
  %240 = vmatprep.subr.mxu0 0.0
  %241 = vmatpush1.xpose.msra.mxu0 0.0
  %242 = vmatprep.subr.mxu0 0.0
  %243 = vmatpush1.xpose.msra.mxu0 0.0
  %244 = vmatprep.subr.mxu0 0.0
  %245 = vmatpush1.xpose.msra.mxu0 0.0
  %246 = vmatprep.subr.mxu0 0.0
  %247 = vmatpush1.xpose.msra.mxu0 0.0
  %248 = vmatprep.subr.mxu0 0.0
  %249 = vmatpush1.xpose.msra.mxu0 0.0
  %250 = vmatprep.subr.mxu0 0.0
  %251 = vmatpush1.xpose.msra.mxu0 0.0
  %252 = vmatprep.subr.mxu0 0.0
  %253 = vmatpush1.xpose.msra.mxu0 0.0
  %254 = vmatprep.subr.mxu0 0.0
  %255 = vmatpush1.xpose.msra.mxu0 0.0
  %256 = vmatprep.subr.mxu0 0.0
  %257 = vmatpush1.xpose.msra.mxu0 0.0
  %258 = vmatprep.subr.mxu0 0.0
  %259 = vmatpush1.xpose.msra.mxu0 0.0
  %260 = vmatprep.subr.mxu0 0.0
  %261 = vmatpush1.xpose.msra.mxu0 0.0
  %262 = vmatprep.subr.mxu0 0.0
  %263 = vmatpush1.xpose.msra.mxu0 0.0
  %264 = vmatprep.subr.mxu0 0.0
  %265 = vmatpush1.xpose.msra.mxu0 0.0
  %266 = vmatprep.mubr.f32.mxu0 0.0
  %267 = vmatmul.mubr.f32.gmra.mrb[0].mxu0 %v198
  %v268 = vpop.f32.mrb[0].mxu0
  %v269 = vadd.f32 0.0, %v268
  %v270 = vpop.f32.mrb[0].mxu0
  %271 = vdwg.mxu0
  %v272 = vmul.f32 %v192, 0.35355338
  %v273 = vmul.f32 %v269, 0.35355338
  %v274 = vsel %vm120, %v272, -inf
  %275 = vmax.xlane.f32.xlu0 %v274
  %v276 = vpop.xlane.xlu0 %275
  %v277 = vsel %vm120, %v273, -inf
  %278 = vmax.xlane.f32.xlu0 %v277
  %v279 = vpop.xlane.xlu0 %278
  %v280 = vsub.f32 %v272, %v276
  %v281 = vsub.f32 %v273, %v279
  %v282 = vmul.f32 %v280, 1.442695
  %v283 = vpow.pop %v282
  %v284 = vmul.f32 %v281, 1.442695
  %v285 = vpow.pop %v284
  %v286 = vsel %vm120, %v283, 0.0
  %287 = vadd.xlane.f32.xlu0 %v286
  %v288 = vpop.xlane.xlu0 %287
  %v289 = vsel %vm120, %v285, 0.0
  %290 = vadd.xlane.f32.xlu0 %v289
  %v291 = vpop.xlane.xlu0 %290
  %v292 = vrcp.pop %v288
  %v293 = vrcp.pop %v291
  %v294 = vmul.f32 %v283, %v292
  %v295 = vmul.f32 %v285, %v293
  %296 = vrot.lane.b32.xlu0 %v109, 64
  %v297 = vpop.permute.xlu0 %296
  %v300 = vsel %vm120, %v294, 0
  %302 = vmatprep.subr.mxu0 0.0
  %303 = vmatpush1.msra.mxu0 %v297
  %304 = vmatprep.subr.mxu0 0.0
  %305 = vmatpush1.msra.mxu0 0.0
  %306 = vmatprep.subr.mxu0 0.0
  %307 = vmatpush1.msra.mxu0 0.0
  %308 = vmatprep.subr.mxu0 0.0
  %309 = vmatpush1.msra.mxu0 0.0
  %310 = vmatprep.subr.mxu0 0.0
  %311 = vmatpush1.msra.mxu0 0.0
  %312 = vmatprep.subr.mxu0 0.0
  %313 = vmatpush1.msra.mxu0 0.0
  %314 = vmatprep.subr.mxu0 0.0
  %315 = vmatpush1.msra.mxu0 0.0
  %316 = vmatprep.subr.mxu0 0.0
  %317 = vmatpush1.msra.mxu0 0.0
  %318 = vmatprep.subr.mxu0 0.0
  %319 = vmatpush1.msra.mxu0 0.0
  %320 = vmatprep.subr.mxu0 0.0
  %321 = vmatpush1.msra.mxu0 0.0
  %322 = vmatprep.subr.mxu0 0.0
  %323 = vmatpush1.msra.mxu0 0.0
  %324 = vmatprep.subr.mxu0 0.0
  %325 = vmatpush1.msra.mxu0 0.0
  %326 = vmatprep.subr.mxu0 0.0
  %327 = vmatpush1.msra.mxu0 0.0
  %328 = vmatprep.subr.mxu0 0.0
  %329 = vmatpush1.msra.mxu0 0.0
  %330 = vmatprep.subr.mxu0 0.0
  %331 = vmatpush1.msra.mxu0 0.0
  %332 = vmatprep.subr.mxu0 0.0
  %333 = vmatpush1.msra.mxu0 0.0
  %334 = vmatprep.subr.mxu0 0.0
  %335 = vmatpush1.msra.mxu0 0.0
  %336 = vmatprep.subr.mxu0 0.0
  %337 = vmatpush1.msra.mxu0 0.0
  %338 = vmatprep.subr.mxu0 0.0
  %339 = vmatpush1.msra.mxu0 0.0
  %340 = vmatprep.subr.mxu0 0.0
  %341 = vmatpush1.msra.mxu0 0.0
  %342 = vmatprep.subr.mxu0 0.0
  %343 = vmatpush1.msra.mxu0 0.0
  %344 = vmatprep.subr.mxu0 0.0
  %345 = vmatpush1.msra.mxu0 0.0
  %346 = vmatprep.subr.mxu0 0.0
  %347 = vmatpush1.msra.mxu0 0.0
  %348 = vmatprep.subr.mxu0 0.0
  %349 = vmatpush1.msra.mxu0 0.0
  %350 = vmatprep.subr.mxu0 0.0
  %351 = vmatpush1.msra.mxu0 0.0
  %352 = vmatprep.subr.mxu0 0.0
  %353 = vmatpush1.msra.mxu0 0.0
  %354 = vmatprep.subr.mxu0 0.0
  %355 = vmatpush1.msra.mxu0 0.0
  %356 = vmatprep.subr.mxu0 0.0
  %357 = vmatpush1.msra.mxu0 0.0
  %358 = vmatprep.subr.mxu0 0.0
  %359 = vmatpush1.msra.mxu0 0.0
  %360 = vmatprep.subr.mxu0 0.0
  %361 = vmatpush1.msra.mxu0 0.0
  %362 = vmatprep.subr.mxu0 0.0
  %363 = vmatpush1.msra.mxu0 0.0
  %364 = vmatprep.subr.mxu0 0.0
  %365 = vmatpush1.msra.mxu0 0.0
  %366 = vmatprep.mubr.f32.mxu0 0.0
  %367 = vmatmul.mubr.f32.gmra.mrb[0].mxu0 %v300
  %v368 = vpop.f32.mrb[0].mxu0
  %v369 = vadd.f32 0.0, %v368
  %v370 = vpop.f32.mrb[0].mxu0
  %371 = vdwg.mxu0
  %372 = vrot.lane.b32.xlu0 %v114, 64
  %v373 = vpop.permute.xlu0 %372
  %v376 = vsel %vm120, %v295, 0
  %378 = vmatprep.subr.mxu0 0.0
  %379 = vmatpush1.msra.mxu0 %v373
  %380 = vmatprep.subr.mxu0 0.0
  %381 = vmatpush1.msra.mxu0 0.0
  %382 = vmatprep.subr.mxu0 0.0
  %383 = vmatpush1.msra.mxu0 0.0
  %384 = vmatprep.subr.mxu0 0.0
  %385 = vmatpush1.msra.mxu0 0.0
  %386 = vmatprep.subr.mxu0 0.0
  %387 = vmatpush1.msra.mxu0 0.0
  %388 = vmatprep.subr.mxu0 0.0
  %389 = vmatpush1.msra.mxu0 0.0
  %390 = vmatprep.subr.mxu0 0.0
  %391 = vmatpush1.msra.mxu0 0.0
  %392 = vmatprep.subr.mxu0 0.0
  %393 = vmatpush1.msra.mxu0 0.0
  %394 = vmatprep.subr.mxu0 0.0
  %395 = vmatpush1.msra.mxu0 0.0
  %396 = vmatprep.subr.mxu0 0.0
  %397 = vmatpush1.msra.mxu0 0.0
  %398 = vmatprep.subr.mxu0 0.0
  %399 = vmatpush1.msra.mxu0 0.0
  %400 = vmatprep.subr.mxu0 0.0
  %401 = vmatpush1.msra.mxu0 0.0
  %402 = vmatprep.subr.mxu0 0.0
  %403 = vmatpush1.msra.mxu0 0.0
  %404 = vmatprep.subr.mxu0 0.0
  %405 = vmatpush1.msra.mxu0 0.0
  %406 = vmatprep.subr.mxu0 0.0
  %407 = vmatpush1.msra.mxu0 0.0
  %408 = vmatprep.subr.mxu0 0.0
  %409 = vmatpush1.msra.mxu0 0.0
  %410 = vmatprep.subr.mxu0 0.0
  %411 = vmatpush1.msra.mxu0 0.0
  %412 = vmatprep.subr.mxu0 0.0
  %413 = vmatpush1.msra.mxu0 0.0
  %414 = vmatprep.subr.mxu0 0.0
  %415 = vmatpush1.msra.mxu0 0.0
  %416 = vmatprep.subr.mxu0 0.0
  %417 = vmatpush1.msra.mxu0 0.0
  %418 = vmatprep.subr.mxu0 0.0
  %419 = vmatpush1.msra.mxu0 0.0
  %420 = vmatprep.subr.mxu0 0.0
  %421 = vmatpush1.msra.mxu0 0.0
  %422 = vmatprep.subr.mxu0 0.0
  %423 = vmatpush1.msra.mxu0 0.0
  %424 = vmatprep.subr.mxu0 0.0
  %425 = vmatpush1.msra.mxu0 0.0
  %426 = vmatprep.subr.mxu0 0.0
  %427 = vmatpush1.msra.mxu0 0.0
  %428 = vmatprep.subr.mxu0 0.0
  %429 = vmatpush1.msra.mxu0 0.0
  %430 = vmatprep.subr.mxu0 0.0
  %431 = vmatpush1.msra.mxu0 0.0
  %432 = vmatprep.subr.mxu0 0.0
  %433 = vmatpush1.msra.mxu0 0.0
  %434 = vmatprep.subr.mxu0 0.0
  %435 = vmatpush1.msra.mxu0 0.0
  %436 = vmatprep.subr.mxu0 0.0
  %437 = vmatpush1.msra.mxu0 0.0
  %438 = vmatprep.subr.mxu0 0.0
  %439 = vmatpush1.msra.mxu0 0.0
  %440 = vmatprep.subr.mxu0 0.0
  %441 = vmatpush1.msra.mxu0 0.0
  %442 = vmatprep.mubr.f32.mxu0 0.0
  %443 = vmatmul.mubr.f32.gmra.mrb[0].mxu0 %v376
  %v444 = vpop.f32.mrb[0].mxu0
  %v445 = vadd.f32 0.0, %v444
  %v446 = vpop.f32.mrb[0].mxu0
  %447 = vdwg.mxu0
  %v448 = vld [vmem:[%s3] sm:$0xff]
  %449 = vrot.lane.b32.xlu0 %v109, 120
  %v450 = vpop.permute.xlu0 %449
  %451 = vrot.lane.b32.xlu0 %v109, 88
  %v452 = vpop.permute.xlu0 %451
  %v453 = vsel %vm120, %v450, 0
  %v455 = vsel %vm120, %v452, 0
  %457 = vmatprep.subr.mxu0 0.0
  %458 = vmatpush1.xpose.msra.mxu0 %v455
  %459 = vmatprep.subr.mxu0 0.0
  %460 = vmatpush1.xpose.msra.mxu0 0.0
  %461 = vmatprep.subr.mxu0 0.0
  %462 = vmatpush1.xpose.msra.mxu0 0.0
  %463 = vmatprep.subr.mxu0 0.0
  %464 = vmatpush1.xpose.msra.mxu0 0.0
  %465 = vmatprep.subr.mxu0 0.0
  %466 = vmatpush1.xpose.msra.mxu0 0.0
  %467 = vmatprep.subr.mxu0 0.0
  %468 = vmatpush1.xpose.msra.mxu0 0.0
  %469 = vmatprep.subr.mxu0 0.0
  %470 = vmatpush1.xpose.msra.mxu0 0.0
  %471 = vmatprep.subr.mxu0 0.0
  %472 = vmatpush1.xpose.msra.mxu0 0.0
  %473 = vmatprep.subr.mxu0 0.0
  %474 = vmatpush1.xpose.msra.mxu0 0.0
  %475 = vmatprep.subr.mxu0 0.0
  %476 = vmatpush1.xpose.msra.mxu0 0.0
  %477 = vmatprep.subr.mxu0 0.0
  %478 = vmatpush1.xpose.msra.mxu0 0.0
  %479 = vmatprep.subr.mxu0 0.0
  %480 = vmatpush1.xpose.msra.mxu0 0.0
  %481 = vmatprep.subr.mxu0 0.0
  %482 = vmatpush1.xpose.msra.mxu0 0.0
  %483 = vmatprep.subr.mxu0 0.0
  %484 = vmatpush1.xpose.msra.mxu0 0.0
  %485 = vmatprep.subr.mxu0 0.0
  %486 = vmatpush1.xpose.msra.mxu0 0.0
  %487 = vmatprep.subr.mxu0 0.0
  %488 = vmatpush1.xpose.msra.mxu0 0.0
  %489 = vmatprep.subr.mxu0 0.0
  %490 = vmatpush1.xpose.msra.mxu0 0.0
  %491 = vmatprep.subr.mxu0 0.0
  %492 = vmatpush1.xpose.msra.mxu0 0.0
  %493 = vmatprep.subr.mxu0 0.0
  %494 = vmatpush1.xpose.msra.mxu0 0.0
  %495 = vmatprep.subr.mxu0 0.0
  %496 = vmatpush1.xpose.msra.mxu0 0.0
  %497 = vmatprep.subr.mxu0 0.0
  %498 = vmatpush1.xpose.msra.mxu0 0.0
  %499 = vmatprep.subr.mxu0 0.0
  %500 = vmatpush1.xpose.msra.mxu0 0.0
  %501 = vmatprep.subr.mxu0 0.0
  %502 = vmatpush1.xpose.msra.mxu0 0.0
  %503 = vmatprep.subr.mxu0 0.0
  %504 = vmatpush1.xpose.msra.mxu0 0.0
  %505 = vmatprep.subr.mxu0 0.0
  %506 = vmatpush1.xpose.msra.mxu0 0.0
  %507 = vmatprep.subr.mxu0 0.0
  %508 = vmatpush1.xpose.msra.mxu0 0.0
  %509 = vmatprep.subr.mxu0 0.0
  %510 = vmatpush1.xpose.msra.mxu0 0.0
  %511 = vmatprep.subr.mxu0 0.0
  %512 = vmatpush1.xpose.msra.mxu0 0.0
  %513 = vmatprep.subr.mxu0 0.0
  %514 = vmatpush1.xpose.msra.mxu0 0.0
  %515 = vmatprep.subr.mxu0 0.0
  %516 = vmatpush1.xpose.msra.mxu0 0.0
  %517 = vmatprep.subr.mxu0 0.0
  %518 = vmatpush1.xpose.msra.mxu0 0.0
  %519 = vmatprep.subr.mxu0 0.0
  %520 = vmatpush1.xpose.msra.mxu0 0.0
  %521 = vmatprep.mubr.f32.mxu0 0.0
  %522 = vmatmul.mubr.f32.gmra.mrb[0].mxu0 %v453
  %v523 = vpop.f32.mrb[0].mxu0
  %v524 = vadd.f32 0.0, %v523
  %v525 = vpop.f32.mrb[0].mxu0
  %526 = vdwg.mxu0
  %527 = vrot.lane.b32.xlu0 %v114, 120
  %v528 = vpop.permute.xlu0 %527
  %529 = vrot.lane.b32.xlu0 %v114, 88
  %v530 = vpop.permute.xlu0 %529
  %v531 = vsel %vm120, %v528, 0
  %v533 = vsel %vm120, %v530, 0
  %535 = vmatprep.subr.mxu0 0.0
  %536 = vmatpush1.xpose.msra.mxu0 %v533
  %537 = vmatprep.subr.mxu0 0.0
  %538 = vmatpush1.xpose.msra.mxu0 0.0
  %539 = vmatprep.subr.mxu0 0.0
  %540 = vmatpush1.xpose.msra.mxu0 0.0
  %541 = vmatprep.subr.mxu0 0.0
  %542 = vmatpush1.xpose.msra.mxu0 0.0
  %543 = vmatprep.subr.mxu0 0.0
  %544 = vmatpush1.xpose.msra.mxu0 0.0
  %545 = vmatprep.subr.mxu0 0.0
  %546 = vmatpush1.xpose.msra.mxu0 0.0
  %547 = vmatprep.subr.mxu0 0.0
  %548 = vmatpush1.xpose.msra.mxu0 0.0
  %549 = vmatprep.subr.mxu0 0.0
  %550 = vmatpush1.xpose.msra.mxu0 0.0
  %551 = vmatprep.subr.mxu0 0.0
  %552 = vmatpush1.xpose.msra.mxu0 0.0
  %553 = vmatprep.subr.mxu0 0.0
  %554 = vmatpush1.xpose.msra.mxu0 0.0
  %555 = vmatprep.subr.mxu0 0.0
  %556 = vmatpush1.xpose.msra.mxu0 0.0
  %557 = vmatprep.subr.mxu0 0.0
  %558 = vmatpush1.xpose.msra.mxu0 0.0
  %559 = vmatprep.subr.mxu0 0.0
  %560 = vmatpush1.xpose.msra.mxu0 0.0
  %561 = vmatprep.subr.mxu0 0.0
  %562 = vmatpush1.xpose.msra.mxu0 0.0
  %563 = vmatprep.subr.mxu0 0.0
  %564 = vmatpush1.xpose.msra.mxu0 0.0
  %565 = vmatprep.subr.mxu0 0.0
  %566 = vmatpush1.xpose.msra.mxu0 0.0
  %567 = vmatprep.subr.mxu0 0.0
  %568 = vmatpush1.xpose.msra.mxu0 0.0
  %569 = vmatprep.subr.mxu0 0.0
  %570 = vmatpush1.xpose.msra.mxu0 0.0
  %571 = vmatprep.subr.mxu0 0.0
  %572 = vmatpush1.xpose.msra.mxu0 0.0
  %573 = vmatprep.subr.mxu0 0.0
  %574 = vmatpush1.xpose.msra.mxu0 0.0
  %575 = vmatprep.subr.mxu0 0.0
  %576 = vmatpush1.xpose.msra.mxu0 0.0
  %577 = vmatprep.subr.mxu0 0.0
  %578 = vmatpush1.xpose.msra.mxu0 0.0
  %579 = vmatprep.subr.mxu0 0.0
  %580 = vmatpush1.xpose.msra.mxu0 0.0
  %581 = vmatprep.subr.mxu0 0.0
  %582 = vmatpush1.xpose.msra.mxu0 0.0
  %583 = vmatprep.subr.mxu0 0.0
  %584 = vmatpush1.xpose.msra.mxu0 0.0
  %585 = vmatprep.subr.mxu0 0.0
  %586 = vmatpush1.xpose.msra.mxu0 0.0
  %587 = vmatprep.subr.mxu0 0.0
  %588 = vmatpush1.xpose.msra.mxu0 0.0
  %589 = vmatprep.subr.mxu0 0.0
  %590 = vmatpush1.xpose.msra.mxu0 0.0
  %591 = vmatprep.subr.mxu0 0.0
  %592 = vmatpush1.xpose.msra.mxu0 0.0
  %593 = vmatprep.subr.mxu0 0.0
  %594 = vmatpush1.xpose.msra.mxu0 0.0
  %595 = vmatprep.subr.mxu0 0.0
  %596 = vmatpush1.xpose.msra.mxu0 0.0
  %597 = vmatprep.subr.mxu0 0.0
  %598 = vmatpush1.xpose.msra.mxu0 0.0
  %599 = vmatprep.mubr.f32.mxu0 0.0
  %600 = vmatmul.mubr.f32.gmra.mrb[0].mxu0 %v531
  %v601 = vpop.f32.mrb[0].mxu0
  %v602 = vadd.f32 0.0, %v601
  %v603 = vpop.f32.mrb[0].mxu0
  %604 = vdwg.mxu0
  %v605 = vmul.f32 %v524, 0.35355338
  %v606 = vmul.f32 %v602, 0.35355338
  %v607 = vsel %vm120, %v605, -inf
  %608 = vmax.xlane.f32.xlu0 %v607
  %v609 = vpop.xlane.xlu0 %608
  %v610 = vsel %vm120, %v606, -inf
  %611 = vmax.xlane.f32.xlu0 %v610
  %v612 = vpop.xlane.xlu0 %611
  %v613 = vsub.f32 %v605, %v609
  %v614 = vsub.f32 %v606, %v612
  %v615 = vmul.f32 %v613, 1.442695
  %v616 = vpow.pop %v615
  %v617 = vmul.f32 %v614, 1.442695
  %v618 = vpow.pop %v617
  %v619 = vsel %vm120, %v616, 0.0
  %620 = vadd.xlane.f32.xlu0 %v619
  %v621 = vpop.xlane.xlu0 %620
  %v622 = vsel %vm120, %v618, 0.0
  %623 = vadd.xlane.f32.xlu0 %v622
  %v624 = vpop.xlane.xlu0 %623
  %v625 = vrcp.pop %v621
  %v626 = vrcp.pop %v624
  %v627 = vmul.f32 %v616, %v625
  %v628 = vmul.f32 %v618, %v626
  %629 = vrot.lane.b32.xlu0 %v109, 56
  %v630 = vpop.permute.xlu0 %629
  %v633 = vsel %vm120, %v627, 0
  %635 = vmatprep.subr.mxu0 0.0
  %636 = vmatpush1.msra.mxu0 %v630
  %637 = vmatprep.subr.mxu0 0.0
  %638 = vmatpush1.msra.mxu0 0.0
  %639 = vmatprep.subr.mxu0 0.0
  %640 = vmatpush1.msra.mxu0 0.0
  %641 = vmatprep.subr.mxu0 0.0
  %642 = vmatpush1.msra.mxu0 0.0
  %643 = vmatprep.subr.mxu0 0.0
  %644 = vmatpush1.msra.mxu0 0.0
  %645 = vmatprep.subr.mxu0 0.0
  %646 = vmatpush1.msra.mxu0 0.0
  %647 = vmatprep.subr.mxu0 0.0
  %648 = vmatpush1.msra.mxu0 0.0
  %649 = vmatprep.subr.mxu0 0.0
  %650 = vmatpush1.msra.mxu0 0.0
  %651 = vmatprep.subr.mxu0 0.0
  %652 = vmatpush1.msra.mxu0 0.0
  %653 = vmatprep.subr.mxu0 0.0
  %654 = vmatpush1.msra.mxu0 0.0
  %655 = vmatprep.subr.mxu0 0.0
  %656 = vmatpush1.msra.mxu0 0.0
  %657 = vmatprep.subr.mxu0 0.0
  %658 = vmatpush1.msra.mxu0 0.0
  %659 = vmatprep.subr.mxu0 0.0
  %660 = vmatpush1.msra.mxu0 0.0
  %661 = vmatprep.subr.mxu0 0.0
  %662 = vmatpush1.msra.mxu0 0.0
  %663 = vmatprep.subr.mxu0 0.0
  %664 = vmatpush1.msra.mxu0 0.0
  %665 = vmatprep.subr.mxu0 0.0
  %666 = vmatpush1.msra.mxu0 0.0
  %667 = vmatprep.subr.mxu0 0.0
  %668 = vmatpush1.msra.mxu0 0.0
  %669 = vmatprep.subr.mxu0 0.0
  %670 = vmatpush1.msra.mxu0 0.0
  %671 = vmatprep.subr.mxu0 0.0
  %672 = vmatpush1.msra.mxu0 0.0
  %673 = vmatprep.subr.mxu0 0.0
  %674 = vmatpush1.msra.mxu0 0.0
  %675 = vmatprep.subr.mxu0 0.0
  %676 = vmatpush1.msra.mxu0 0.0
  %677 = vmatprep.subr.mxu0 0.0
  %678 = vmatpush1.msra.mxu0 0.0
  %679 = vmatprep.subr.mxu0 0.0
  %680 = vmatpush1.msra.mxu0 0.0
  %681 = vmatprep.subr.mxu0 0.0
  %682 = vmatpush1.msra.mxu0 0.0
  %683 = vmatprep.subr.mxu0 0.0
  %684 = vmatpush1.msra.mxu0 0.0
  %685 = vmatprep.subr.mxu0 0.0
  %686 = vmatpush1.msra.mxu0 0.0
  %687 = vmatprep.subr.mxu0 0.0
  %688 = vmatpush1.msra.mxu0 0.0
  %689 = vmatprep.subr.mxu0 0.0
  %690 = vmatpush1.msra.mxu0 0.0
  %691 = vmatprep.subr.mxu0 0.0
  %692 = vmatpush1.msra.mxu0 0.0
  %693 = vmatprep.subr.mxu0 0.0
  %694 = vmatpush1.msra.mxu0 0.0
  %695 = vmatprep.subr.mxu0 0.0
  %696 = vmatpush1.msra.mxu0 0.0
  %697 = vmatprep.subr.mxu0 0.0
  %698 = vmatpush1.msra.mxu0 0.0
  %699 = vmatprep.mubr.f32.mxu0 0.0
  %700 = vmatmul.mubr.f32.gmra.mrb[0].mxu0 %v633
  %v701 = vpop.f32.mrb[0].mxu0
  %v702 = vadd.f32 0.0, %v701
  %v703 = vpop.f32.mrb[0].mxu0
  %704 = vdwg.mxu0
  %705 = vrot.lane.b32.xlu0 %v114, 56
  %v706 = vpop.permute.xlu0 %705
  %v709 = vsel %vm120, %v628, 0
  %711 = vmatprep.subr.mxu0 0.0
  %712 = vmatpush1.msra.mxu0 %v706
  %713 = vmatprep.subr.mxu0 0.0
  %714 = vmatpush1.msra.mxu0 0.0
  %715 = vmatprep.subr.mxu0 0.0
  %716 = vmatpush1.msra.mxu0 0.0
  %717 = vmatprep.subr.mxu0 0.0
  %718 = vmatpush1.msra.mxu0 0.0
  %719 = vmatprep.subr.mxu0 0.0
  %720 = vmatpush1.msra.mxu0 0.0
  %721 = vmatprep.subr.mxu0 0.0
  %722 = vmatpush1.msra.mxu0 0.0
  %723 = vmatprep.subr.mxu0 0.0
  %724 = vmatpush1.msra.mxu0 0.0
  %725 = vmatprep.subr.mxu0 0.0
  %726 = vmatpush1.msra.mxu0 0.0
  %727 = vmatprep.subr.mxu0 0.0
  %728 = vmatpush1.msra.mxu0 0.0
  %729 = vmatprep.subr.mxu0 0.0
  %730 = vmatpush1.msra.mxu0 0.0
  %731 = vmatprep.subr.mxu0 0.0
  %732 = vmatpush1.msra.mxu0 0.0
  %733 = vmatprep.subr.mxu0 0.0
  %734 = vmatpush1.msra.mxu0 0.0
  %735 = vmatprep.subr.mxu0 0.0
  %736 = vmatpush1.msra.mxu0 0.0
  %737 = vmatprep.subr.mxu0 0.0
  %738 = vmatpush1.msra.mxu0 0.0
  %739 = vmatprep.subr.mxu0 0.0
  %740 = vmatpush1.msra.mxu0 0.0
  %741 = vmatprep.subr.mxu0 0.0
  %742 = vmatpush1.msra.mxu0 0.0
  %743 = vmatprep.subr.mxu0 0.0
  %744 = vmatpush1.msra.mxu0 0.0
  %745 = vmatprep.subr.mxu0 0.0
  %746 = vmatpush1.msra.mxu0 0.0
  %747 = vmatprep.subr.mxu0 0.0
  %748 = vmatpush1.msra.mxu0 0.0
  %749 = vmatprep.subr.mxu0 0.0
  %750 = vmatpush1.msra.mxu0 0.0
  %751 = vmatprep.subr.mxu0 0.0
  %752 = vmatpush1.msra.mxu0 0.0
  %753 = vmatprep.subr.mxu0 0.0
  %754 = vmatpush1.msra.mxu0 0.0
  %755 = vmatprep.subr.mxu0 0.0
  %756 = vmatpush1.msra.mxu0 0.0
  %757 = vmatprep.subr.mxu0 0.0
  %758 = vmatpush1.msra.mxu0 0.0
  %759 = vmatprep.subr.mxu0 0.0
  %760 = vmatpush1.msra.mxu0 0.0
  %761 = vmatprep.subr.mxu0 0.0
  %762 = vmatpush1.msra.mxu0 0.0
  %763 = vmatprep.subr.mxu0 0.0
  %764 = vmatpush1.msra.mxu0 0.0
  %765 = vmatprep.subr.mxu0 0.0
  %766 = vmatpush1.msra.mxu0 0.0
  %767 = vmatprep.subr.mxu0 0.0
  %768 = vmatpush1.msra.mxu0 0.0
  %769 = vmatprep.subr.mxu0 0.0
  %770 = vmatpush1.msra.mxu0 0.0
  %771 = vmatprep.subr.mxu0 0.0
  %772 = vmatpush1.msra.mxu0 0.0
  %773 = vmatprep.subr.mxu0 0.0
  %774 = vmatpush1.msra.mxu0 0.0
  %775 = vmatprep.mubr.f32.mxu0 0.0
  %776 = vmatmul.mubr.f32.gmra.mrb[0].mxu0 %v709
  %v777 = vpop.f32.mrb[0].mxu0
  %v778 = vadd.f32 0.0, %v777
  %v779 = vpop.f32.mrb[0].mxu0
  %780 = vdwg.mxu0
  %v781 = vld [vmem:[%s3 + $0x8] sm:$0xff]
  %v783 = vsel %vm120, %v702, 0
  %v786 = vsel %vm120, %v778, 0
  %788 = vmatprep.subr.mxu0 0.0
  %789 = vmatpush1.msra.mxu0 %v781
  %790 = vmatprep.subr.mxu0 0.0
  %791 = vmatpush1.msra.mxu0 0.0
  %792 = vmatprep.subr.mxu0 0.0
  %793 = vmatpush1.msra.mxu0 0.0
  %794 = vmatprep.subr.mxu0 0.0
  %795 = vmatpush1.msra.mxu0 0.0
  %796 = vmatprep.subr.mxu0 0.0
  %797 = vmatpush1.msra.mxu0 0.0
  %798 = vmatprep.subr.mxu0 0.0
  %799 = vmatpush1.msra.mxu0 0.0
  %800 = vmatprep.subr.mxu0 0.0
  %801 = vmatpush1.msra.mxu0 0.0
  %802 = vmatprep.subr.mxu0 0.0
  %803 = vmatpush1.msra.mxu0 0.0
  %804 = vmatprep.subr.mxu0 0.0
  %805 = vmatpush1.msra.mxu0 0.0
  %806 = vmatprep.subr.mxu0 0.0
  %807 = vmatpush1.msra.mxu0 0.0
  %808 = vmatprep.subr.mxu0 0.0
  %809 = vmatpush1.msra.mxu0 0.0
  %810 = vmatprep.subr.mxu0 0.0
  %811 = vmatpush1.msra.mxu0 0.0
  %812 = vmatprep.subr.mxu0 0.0
  %813 = vmatpush1.msra.mxu0 0.0
  %814 = vmatprep.subr.mxu0 0.0
  %815 = vmatpush1.msra.mxu0 0.0
  %816 = vmatprep.subr.mxu0 0.0
  %817 = vmatpush1.msra.mxu0 0.0
  %818 = vmatprep.subr.mxu0 0.0
  %819 = vmatpush1.msra.mxu0 0.0
  %820 = vmatprep.subr.mxu0 0.0
  %821 = vmatpush1.msra.mxu0 0.0
  %822 = vmatprep.subr.mxu0 0.0
  %823 = vmatpush1.msra.mxu0 0.0
  %824 = vmatprep.subr.mxu0 0.0
  %825 = vmatpush1.msra.mxu0 0.0
  %826 = vmatprep.subr.mxu0 0.0
  %827 = vmatpush1.msra.mxu0 0.0
  %828 = vmatprep.subr.mxu0 0.0
  %829 = vmatpush1.msra.mxu0 0.0
  %830 = vmatprep.subr.mxu0 0.0
  %831 = vmatpush1.msra.mxu0 0.0
  %832 = vmatprep.subr.mxu0 0.0
  %833 = vmatpush1.msra.mxu0 0.0
  %834 = vmatprep.subr.mxu0 0.0
  %835 = vmatpush1.msra.mxu0 0.0
  %836 = vmatprep.subr.mxu0 0.0
  %837 = vmatpush1.msra.mxu0 0.0
  %838 = vmatprep.subr.mxu0 0.0
  %839 = vmatpush1.msra.mxu0 0.0
  %840 = vmatprep.subr.mxu0 0.0
  %841 = vmatpush1.msra.mxu0 0.0
  %842 = vmatprep.subr.mxu0 0.0
  %843 = vmatpush1.msra.mxu0 0.0
  %844 = vmatprep.subr.mxu0 0.0
  %845 = vmatpush1.msra.mxu0 0.0
  %846 = vmatprep.subr.mxu0 0.0
  %847 = vmatpush1.msra.mxu0 0.0
  %848 = vmatprep.subr.mxu0 0.0
  %849 = vmatpush1.msra.mxu0 0.0
  %850 = vmatprep.subr.mxu0 0.0
  %851 = vmatpush1.msra.mxu0 0.0
  %852 = vmatprep.mubr.f32.mxu0 0.0
  %853 = vmatmul.mubr.f32.gmra.mrb[0].mxu0 %v783
  %v854 = vpop.f32.mrb[0].mxu0
  %v855 = vadd.f32 0.0, %v854
  %v856 = vpop.f32.mrb[0].mxu0
  %857 = vmatprep.mubr.f32.mxu0 0.0
  %858 = vmatmul.mubr.f32.gmra.mrb[0].mxu0 %v786
  %v859 = vpop.f32.mrb[0].mxu0
  %v860 = vadd.f32 0.0, %v859
  %v861 = vpop.f32.mrb[0].mxu0
  %862 = vdwg.mxu0
  %v864 = vsel %vm120, %v369, 0
  %v867 = vsel %vm120, %v445, 0
  %869 = vmatprep.subr.mxu0 0.0
  %870 = vmatpush1.msra.mxu0 %v448
  %871 = vmatprep.subr.mxu0 0.0
  %872 = vmatpush1.msra.mxu0 0.0
  %873 = vmatprep.subr.mxu0 0.0
  %874 = vmatpush1.msra.mxu0 0.0
  %875 = vmatprep.subr.mxu0 0.0
  %876 = vmatpush1.msra.mxu0 0.0
  %877 = vmatprep.subr.mxu0 0.0
  %878 = vmatpush1.msra.mxu0 0.0
  %879 = vmatprep.subr.mxu0 0.0
  %880 = vmatpush1.msra.mxu0 0.0
  %881 = vmatprep.subr.mxu0 0.0
  %882 = vmatpush1.msra.mxu0 0.0
  %883 = vmatprep.subr.mxu0 0.0
  %884 = vmatpush1.msra.mxu0 0.0
  %885 = vmatprep.subr.mxu0 0.0
  %886 = vmatpush1.msra.mxu0 0.0
  %887 = vmatprep.subr.mxu0 0.0
  %888 = vmatpush1.msra.mxu0 0.0
  %889 = vmatprep.subr.mxu0 0.0
  %890 = vmatpush1.msra.mxu0 0.0
  %891 = vmatprep.subr.mxu0 0.0
  %892 = vmatpush1.msra.mxu0 0.0
  %893 = vmatprep.subr.mxu0 0.0
  %894 = vmatpush1.msra.mxu0 0.0
  %895 = vmatprep.subr.mxu0 0.0
  %896 = vmatpush1.msra.mxu0 0.0
  %897 = vmatprep.subr.mxu0 0.0
  %898 = vmatpush1.msra.mxu0 0.0
  %899 = vmatprep.subr.mxu0 0.0
  %900 = vmatpush1.msra.mxu0 0.0
  %901 = vmatprep.subr.mxu0 0.0
  %902 = vmatpush1.msra.mxu0 0.0
  %903 = vmatprep.subr.mxu0 0.0
  %904 = vmatpush1.msra.mxu0 0.0
  %905 = vmatprep.subr.mxu0 0.0
  %906 = vmatpush1.msra.mxu0 0.0
  %907 = vmatprep.subr.mxu0 0.0
  %908 = vmatpush1.msra.mxu0 0.0
  %909 = vmatprep.subr.mxu0 0.0
  %910 = vmatpush1.msra.mxu0 0.0
  %911 = vmatprep.subr.mxu0 0.0
  %912 = vmatpush1.msra.mxu0 0.0
  %913 = vmatprep.subr.mxu0 0.0
  %914 = vmatpush1.msra.mxu0 0.0
  %915 = vmatprep.subr.mxu0 0.0
  %916 = vmatpush1.msra.mxu0 0.0
  %917 = vmatprep.subr.mxu0 0.0
  %918 = vmatpush1.msra.mxu0 0.0
  %919 = vmatprep.subr.mxu0 0.0
  %920 = vmatpush1.msra.mxu0 0.0
  %921 = vmatprep.subr.mxu0 0.0
  %922 = vmatpush1.msra.mxu0 0.0
  %923 = vmatprep.subr.mxu0 0.0
  %924 = vmatpush1.msra.mxu0 0.0
  %925 = vmatprep.subr.mxu0 0.0
  %926 = vmatpush1.msra.mxu0 0.0
  %927 = vmatprep.subr.mxu0 0.0
  %928 = vmatpush1.msra.mxu0 0.0
  %929 = vmatprep.subr.mxu0 0.0
  %930 = vmatpush1.msra.mxu0 0.0
  %931 = vmatprep.subr.mxu0 0.0
  %932 = vmatpush1.msra.mxu0 0.0
  %933 = vmatprep.mubr.f32.mxu0 0.0
  %934 = vmatmul.mubr.f32.gmra.mrb[0].mxu0 %v864
  %v935 = vpop.f32.mrb[0].mxu0
  %v936 = vadd.f32 %v855, %v935
  %v937 = vpop.f32.mrb[0].mxu0
  %938 = vmatprep.mubr.f32.mxu0 0.0
  %939 = vmatmul.mubr.f32.gmra.mrb[0].mxu0 %v867
  %v940 = vpop.f32.mrb[0].mxu0
  %v941 = vadd.f32 %v860, %v940
  %v942 = vpop.f32.mrb[0].mxu0
  %943 = vdwg.mxu0
  %944 = vrot.lane.b32.xlu0 %v109, 112
  %v945 = vpop.permute.xlu0 %944
  %946 = vrot.lane.b32.xlu0 %v109, 80
  %v947 = vpop.permute.xlu0 %946
  %v948 = vsel %vm120, %v945, 0
  %v950 = vsel %vm120, %v947, 0
  %952 = vmatprep.subr.mxu0 0.0
  %953 = vmatpush1.xpose.msra.mxu0 %v950
  %954 = vmatprep.subr.mxu0 0.0
  %955 = vmatpush1.xpose.msra.mxu0 0.0
  %956 = vmatprep.subr.mxu0 0.0
  %957 = vmatpush1.xpose.msra.mxu0 0.0
  %958 = vmatprep.subr.mxu0 0.0
  %959 = vmatpush1.xpose.msra.mxu0 0.0
  %960 = vmatprep.subr.mxu0 0.0
  %961 = vmatpush1.xpose.msra.mxu0 0.0
  %962 = vmatprep.subr.mxu0 0.0
  %963 = vmatpush1.xpose.msra.mxu0 0.0
  %964 = vmatprep.subr.mxu0 0.0
  %965 = vmatpush1.xpose.msra.mxu0 0.0
  %966 = vmatprep.subr.mxu0 0.0
  %967 = vmatpush1.xpose.msra.mxu0 0.0
  %968 = vmatprep.subr.mxu0 0.0
  %969 = vmatpush1.xpose.msra.mxu0 0.0
  %970 = vmatprep.subr.mxu0 0.0
  %971 = vmatpush1.xpose.msra.mxu0 0.0
  %972 = vmatprep.subr.mxu0 0.0
  %973 = vmatpush1.xpose.msra.mxu0 0.0
  %974 = vmatprep.subr.mxu0 0.0
  %975 = vmatpush1.xpose.msra.mxu0 0.0
  %976 = vmatprep.subr.mxu0 0.0
  %977 = vmatpush1.xpose.msra.mxu0 0.0
  %978 = vmatprep.subr.mxu0 0.0
  %979 = vmatpush1.xpose.msra.mxu0 0.0
  %980 = vmatprep.subr.mxu0 0.0
  %981 = vmatpush1.xpose.msra.mxu0 0.0
  %982 = vmatprep.subr.mxu0 0.0
  %983 = vmatpush1.xpose.msra.mxu0 0.0
  %984 = vmatprep.subr.mxu0 0.0
  %985 = vmatpush1.xpose.msra.mxu0 0.0
  %986 = vmatprep.subr.mxu0 0.0
  %987 = vmatpush1.xpose.msra.mxu0 0.0
  %988 = vmatprep.subr.mxu0 0.0
  %989 = vmatpush1.xpose.msra.mxu0 0.0
  %990 = vmatprep.subr.mxu0 0.0
  %991 = vmatpush1.xpose.msra.mxu0 0.0
  %992 = vmatprep.subr.mxu0 0.0
  %993 = vmatpush1.xpose.msra.mxu0 0.0
  %994 = vmatprep.subr.mxu0 0.0
  %995 = vmatpush1.xpose.msra.mxu0 0.0
  %996 = vmatprep.subr.mxu0 0.0
  %997 = vmatpush1.xpose.msra.mxu0 0.0
  %998 = vmatprep.subr.mxu0 0.0
  %999 = vmatpush1.xpose.msra.mxu0 0.0
  %1000 = vmatprep.subr.mxu0 0.0
  %1001 = vmatpush1.xpose.msra.mxu0 0.0
  %1002 = vmatprep.subr.mxu0 0.0
  %1003 = vmatpush1.xpose.msra.mxu0 0.0
  %1004 = vmatprep.subr.mxu0 0.0
  %1005 = vmatpush1.xpose.msra.mxu0 0.0
  %1006 = vmatprep.subr.mxu0 0.0
  %1007 = vmatpush1.xpose.msra.mxu0 0.0
  %1008 = vmatprep.subr.mxu0 0.0
  %1009 = vmatpush1.xpose.msra.mxu0 0.0
  %1010 = vmatprep.subr.mxu0 0.0
  %1011 = vmatpush1.xpose.msra.mxu0 0.0
  %1012 = vmatprep.subr.mxu0 0.0
  %1013 = vmatpush1.xpose.msra.mxu0 0.0
  %1014 = vmatprep.subr.mxu0 0.0
  %1015 = vmatpush1.xpose.msra.mxu0 0.0
  %1016 = vmatprep.mubr.f32.mxu0 0.0
  %1017 = vmatmul.mubr.f32.gmra.mrb[0].mxu0 %v948
  %v1018 = vpop.f32.mrb[0].mxu0
  %v1019 = vadd.f32 0.0, %v1018
  %v1020 = vpop.f32.mrb[0].mxu0
  %1021 = vdwg.mxu0
  %1022 = vrot.lane.b32.xlu0 %v114, 112
  %v1023 = vpop.permute.xlu0 %1022
  %1024 = vrot.lane.b32.xlu0 %v114, 80
  %v1025 = vpop.permute.xlu0 %1024
  %v1026 = vsel %vm120, %v1023, 0
  %v1028 = vsel %vm120, %v1025, 0
  %1030 = vmatprep.subr.mxu0 0.0
  %1031 = vmatpush1.xpose.msra.mxu0 %v1028
  %1032 = vmatprep.subr.mxu0 0.0
  %1033 = vmatpush1.xpose.msra.mxu0 0.0
  %1034 = vmatprep.subr.mxu0 0.0
  %1035 = vmatpush1.xpose.msra.mxu0 0.0
  %1036 = vmatprep.subr.mxu0 0.0
  %1037 = vmatpush1.xpose.msra.mxu0 0.0
  %1038 = vmatprep.subr.mxu0 0.0
  %1039 = vmatpush1.xpose.msra.mxu0 0.0
  %1040 = vmatprep.subr.mxu0 0.0
  %1041 = vmatpush1.xpose.msra.mxu0 0.0
  %1042 = vmatprep.subr.mxu0 0.0
  %1043 = vmatpush1.xpose.msra.mxu0 0.0
  %1044 = vmatprep.subr.mxu0 0.0
  %1045 = vmatpush1.xpose.msra.mxu0 0.0
  %1046 = vmatprep.subr.mxu0 0.0
  %1047 = vmatpush1.xpose.msra.mxu0 0.0
  %1048 = vmatprep.subr.mxu0 0.0
  %1049 = vmatpush1.xpose.msra.mxu0 0.0
  %1050 = vmatprep.subr.mxu0 0.0
  %1051 = vmatpush1.xpose.msra.mxu0 0.0
  %1052 = vmatprep.subr.mxu0 0.0
  %1053 = vmatpush1.xpose.msra.mxu0 0.0
  %1054 = vmatprep.subr.mxu0 0.0
  %1055 = vmatpush1.xpose.msra.mxu0 0.0
  %1056 = vmatprep.subr.mxu0 0.0
  %1057 = vmatpush1.xpose.msra.mxu0 0.0
  %1058 = vmatprep.subr.mxu0 0.0
  %1059 = vmatpush1.xpose.msra.mxu0 0.0
  %1060 = vmatprep.subr.mxu0 0.0
  %1061 = vmatpush1.xpose.msra.mxu0 0.0
  %1062 = vmatprep.subr.mxu0 0.0
  %1063 = vmatpush1.xpose.msra.mxu0 0.0
  %1064 = vmatprep.subr.mxu0 0.0
  %1065 = vmatpush1.xpose.msra.mxu0 0.0
  %1066 = vmatprep.subr.mxu0 0.0
  %1067 = vmatpush1.xpose.msra.mxu0 0.0
  %1068 = vmatprep.subr.mxu0 0.0
  %1069 = vmatpush1.xpose.msra.mxu0 0.0
  %1070 = vmatprep.subr.mxu0 0.0
  %1071 = vmatpush1.xpose.msra.mxu0 0.0
  %1072 = vmatprep.subr.mxu0 0.0
  %1073 = vmatpush1.xpose.msra.mxu0 0.0
  %1074 = vmatprep.subr.mxu0 0.0
  %1075 = vmatpush1.xpose.msra.mxu0 0.0
  %1076 = vmatprep.subr.mxu0 0.0
  %1077 = vmatpush1.xpose.msra.mxu0 0.0
  %1078 = vmatprep.subr.mxu0 0.0
  %1079 = vmatpush1.xpose.msra.mxu0 0.0
  %1080 = vmatprep.subr.mxu0 0.0
  %1081 = vmatpush1.xpose.msra.mxu0 0.0
  %1082 = vmatprep.subr.mxu0 0.0
  %1083 = vmatpush1.xpose.msra.mxu0 0.0
  %1084 = vmatprep.subr.mxu0 0.0
  %1085 = vmatpush1.xpose.msra.mxu0 0.0
  %1086 = vmatprep.subr.mxu0 0.0
  %1087 = vmatpush1.xpose.msra.mxu0 0.0
  %1088 = vmatprep.subr.mxu0 0.0
  %1089 = vmatpush1.xpose.msra.mxu0 0.0
  %1090 = vmatprep.subr.mxu0 0.0
  %1091 = vmatpush1.xpose.msra.mxu0 0.0
  %1092 = vmatprep.subr.mxu0 0.0
  %1093 = vmatpush1.xpose.msra.mxu0 0.0
  %1094 = vmatprep.mubr.f32.mxu0 0.0
  %1095 = vmatmul.mubr.f32.gmra.mrb[0].mxu0 %v1026
  %v1096 = vpop.f32.mrb[0].mxu0
  %v1097 = vadd.f32 0.0, %v1096
  %v1098 = vpop.f32.mrb[0].mxu0
  %1099 = vdwg.mxu0
  %v1100 = vmul.f32 %v1019, 0.35355338
  %v1101 = vmul.f32 %v1097, 0.35355338
  %v1102 = vsel %vm120, %v1100, -inf
  %1103 = vmax.xlane.f32.xlu0 %v1102
  %v1104 = vpop.xlane.xlu0 %1103
  %v1105 = vsel %vm120, %v1101, -inf
  %1106 = vmax.xlane.f32.xlu0 %v1105
  %v1107 = vpop.xlane.xlu0 %1106
  %v1108 = vsub.f32 %v1100, %v1104
  %v1109 = vsub.f32 %v1101, %v1107
  %v1110 = vmul.f32 %v1108, 1.442695
  %v1111 = vpow.pop %v1110
  %v1112 = vmul.f32 %v1109, 1.442695
  %v1113 = vpow.pop %v1112
  %v1114 = vsel %vm120, %v1111, 0.0
  %1115 = vadd.xlane.f32.xlu0 %v1114
  %v1116 = vpop.xlane.xlu0 %1115
  %v1117 = vsel %vm120, %v1113, 0.0
  %1118 = vadd.xlane.f32.xlu0 %v1117
  %v1119 = vpop.xlane.xlu0 %1118
  %v1120 = vrcp.pop %v1116
  %v1121 = vrcp.pop %v1119
  %v1122 = vmul.f32 %v1111, %v1120
  %v1123 = vmul.f32 %v1113, %v1121
  %1124 = vrot.lane.b32.xlu0 %v109, 48
  %v1125 = vpop.permute.xlu0 %1124
  %v1128 = vsel %vm120, %v1122, 0
  %1130 = vmatprep.subr.mxu0 0.0
  %1131 = vmatpush1.msra.mxu0 %v1125
  %1132 = vmatprep.subr.mxu0 0.0
  %1133 = vmatpush1.msra.mxu0 0.0
  %1134 = vmatprep.subr.mxu0 0.0
  %1135 = vmatpush1.msra.mxu0 0.0
  %1136 = vmatprep.subr.mxu0 0.0
  %1137 = vmatpush1.msra.mxu0 0.0
  %1138 = vmatprep.subr.mxu0 0.0
  %1139 = vmatpush1.msra.mxu0 0.0
  %1140 = vmatprep.subr.mxu0 0.0
  %1141 = vmatpush1.msra.mxu0 0.0
  %1142 = vmatprep.subr.mxu0 0.0
  %1143 = vmatpush1.msra.mxu0 0.0
  %1144 = vmatprep.subr.mxu0 0.0
  %1145 = vmatpush1.msra.mxu0 0.0
  %1146 = vmatprep.subr.mxu0 0.0
  %1147 = vmatpush1.msra.mxu0 0.0
  %1148 = vmatprep.subr.mxu0 0.0
  %1149 = vmatpush1.msra.mxu0 0.0
  %1150 = vmatprep.subr.mxu0 0.0
  %1151 = vmatpush1.msra.mxu0 0.0
  %1152 = vmatprep.subr.mxu0 0.0
  %1153 = vmatpush1.msra.mxu0 0.0
  %1154 = vmatprep.subr.mxu0 0.0
  %1155 = vmatpush1.msra.mxu0 0.0
  %1156 = vmatprep.subr.mxu0 0.0
  %1157 = vmatpush1.msra.mxu0 0.0
  %1158 = vmatprep.subr.mxu0 0.0
  %1159 = vmatpush1.msra.mxu0 0.0
  %1160 = vmatprep.subr.mxu0 0.0
  %1161 = vmatpush1.msra.mxu0 0.0
  %1162 = vmatprep.subr.mxu0 0.0
  %1163 = vmatpush1.msra.mxu0 0.0
  %1164 = vmatprep.subr.mxu0 0.0
  %1165 = vmatpush1.msra.mxu0 0.0
  %1166 = vmatprep.subr.mxu0 0.0
  %1167 = vmatpush1.msra.mxu0 0.0
  %1168 = vmatprep.subr.mxu0 0.0
  %1169 = vmatpush1.msra.mxu0 0.0
  %1170 = vmatprep.subr.mxu0 0.0
  %1171 = vmatpush1.msra.mxu0 0.0
  %1172 = vmatprep.subr.mxu0 0.0
  %1173 = vmatpush1.msra.mxu0 0.0
  %1174 = vmatprep.subr.mxu0 0.0
  %1175 = vmatpush1.msra.mxu0 0.0
  %1176 = vmatprep.subr.mxu0 0.0
  %1177 = vmatpush1.msra.mxu0 0.0
  %1178 = vmatprep.subr.mxu0 0.0
  %1179 = vmatpush1.msra.mxu0 0.0
  %1180 = vmatprep.subr.mxu0 0.0
  %1181 = vmatpush1.msra.mxu0 0.0
  %1182 = vmatprep.subr.mxu0 0.0
  %1183 = vmatpush1.msra.mxu0 0.0
  %1184 = vmatprep.subr.mxu0 0.0
  %1185 = vmatpush1.msra.mxu0 0.0
  %1186 = vmatprep.subr.mxu0 0.0
  %1187 = vmatpush1.msra.mxu0 0.0
  %1188 = vmatprep.subr.mxu0 0.0
  %1189 = vmatpush1.msra.mxu0 0.0
  %1190 = vmatprep.subr.mxu0 0.0
  %1191 = vmatpush1.msra.mxu0 0.0
  %1192 = vmatprep.subr.mxu0 0.0
  %1193 = vmatpush1.msra.mxu0 0.0
  %1194 = vmatprep.mubr.f32.mxu0 0.0
  %1195 = vmatmul.mubr.f32.gmra.mrb[0].mxu0 %v1128
  %v1196 = vpop.f32.mrb[0].mxu0
  %v1197 = vadd.f32 0.0, %v1196
  %v1198 = vpop.f32.mrb[0].mxu0
  %1199 = vdwg.mxu0
  %1200 = vrot.lane.b32.xlu0 %v114, 48
  %v1201 = vpop.permute.xlu0 %1200
  %v1204 = vsel %vm120, %v1123, 0
  %1206 = vmatprep.subr.mxu0 0.0
  %1207 = vmatpush1.msra.mxu0 %v1201
  %1208 = vmatprep.subr.mxu0 0.0
  %1209 = vmatpush1.msra.mxu0 0.0
  %1210 = vmatprep.subr.mxu0 0.0
  %1211 = vmatpush1.msra.mxu0 0.0
  %1212 = vmatprep.subr.mxu0 0.0
  %1213 = vmatpush1.msra.mxu0 0.0
  %1214 = vmatprep.subr.mxu0 0.0
  %1215 = vmatpush1.msra.mxu0 0.0
  %1216 = vmatprep.subr.mxu0 0.0
  %1217 = vmatpush1.msra.mxu0 0.0
  %1218 = vmatprep.subr.mxu0 0.0
  %1219 = vmatpush1.msra.mxu0 0.0
  %1220 = vmatprep.subr.mxu0 0.0
  %1221 = vmatpush1.msra.mxu0 0.0
  %1222 = vmatprep.subr.mxu0 0.0
  %1223 = vmatpush1.msra.mxu0 0.0
  %1224 = vmatprep.subr.mxu0 0.0
  %1225 = vmatpush1.msra.mxu0 0.0
  %1226 = vmatprep.subr.mxu0 0.0
  %1227 = vmatpush1.msra.mxu0 0.0
  %1228 = vmatprep.subr.mxu0 0.0
  %1229 = vmatpush1.msra.mxu0 0.0
  %1230 = vmatprep.subr.mxu0 0.0
  %1231 = vmatpush1.msra.mxu0 0.0
  %1232 = vmatprep.subr.mxu0 0.0
  %1233 = vmatpush1.msra.mxu0 0.0
  %1234 = vmatprep.subr.mxu0 0.0
  %1235 = vmatpush1.msra.mxu0 0.0
  %1236 = vmatprep.subr.mxu0 0.0
  %1237 = vmatpush1.msra.mxu0 0.0
  %1238 = vmatprep.subr.mxu0 0.0
  %1239 = vmatpush1.msra.mxu0 0.0
  %1240 = vmatprep.subr.mxu0 0.0
  %1241 = vmatpush1.msra.mxu0 0.0
  %1242 = vmatprep.subr.mxu0 0.0
  %1243 = vmatpush1.msra.mxu0 0.0
  %1244 = vmatprep.subr.mxu0 0.0
  %1245 = vmatpush1.msra.mxu0 0.0
  %1246 = vmatprep.subr.mxu0 0.0
  %1247 = vmatpush1.msra.mxu0 0.0
  %1248 = vmatprep.subr.mxu0 0.0
  %1249 = vmatpush1.msra.mxu0 0.0
  %1250 = vmatprep.subr.mxu0 0.0
  %1251 = vmatpush1.msra.mxu0 0.0
  %1252 = vmatprep.subr.mxu0 0.0
  %1253 = vmatpush1.msra.mxu0 0.0
  %1254 = vmatprep.subr.mxu0 0.0
  %1255 = vmatpush1.msra.mxu0 0.0
  %1256 = vmatprep.subr.mxu0 0.0
  %1257 = vmatpush1.msra.mxu0 0.0
  %1258 = vmatprep.subr.mxu0 0.0
  %1259 = vmatpush1.msra.mxu0 0.0
  %1260 = vmatprep.subr.mxu0 0.0
  %1261 = vmatpush1.msra.mxu0 0.0
  %1262 = vmatprep.subr.mxu0 0.0
  %1263 = vmatpush1.msra.mxu0 0.0
  %1264 = vmatprep.subr.mxu0 0.0
  %1265 = vmatpush1.msra.mxu0 0.0
  %1266 = vmatprep.subr.mxu0 0.0
  %1267 = vmatpush1.msra.mxu0 0.0
  %1268 = vmatprep.subr.mxu0 0.0
  %1269 = vmatpush1.msra.mxu0 0.0
  %1270 = vmatprep.mubr.f32.mxu0 0.0
  %1271 = vmatmul.mubr.f32.gmra.mrb[0].mxu0 %v1204
  %v1272 = vpop.f32.mrb[0].mxu0
  %v1273 = vadd.f32 0.0, %v1272
  %v1274 = vpop.f32.mrb[0].mxu0
  %1275 = vdwg.mxu0
  %v1276 = vld [vmem:[%s3 + $0x10] sm:$0xff]
  %v1278 = vsel %vm120, %v1197, 0
  %v1281 = vsel %vm120, %v1273, 0
  %1283 = vmatprep.subr.mxu0 0.0
  %1284 = vmatpush1.msra.mxu0 %v1276
  %1285 = vmatprep.subr.mxu0 0.0
  %1286 = vmatpush1.msra.mxu0 0.0
  %1287 = vmatprep.subr.mxu0 0.0
  %1288 = vmatpush1.msra.mxu0 0.0
  %1289 = vmatprep.subr.mxu0 0.0
  %1290 = vmatpush1.msra.mxu0 0.0
  %1291 = vmatprep.subr.mxu0 0.0
  %1292 = vmatpush1.msra.mxu0 0.0
  %1293 = vmatprep.subr.mxu0 0.0
  %1294 = vmatpush1.msra.mxu0 0.0
  %1295 = vmatprep.subr.mxu0 0.0
  %1296 = vmatpush1.msra.mxu0 0.0
  %1297 = vmatprep.subr.mxu0 0.0
  %1298 = vmatpush1.msra.mxu0 0.0
  %1299 = vmatprep.subr.mxu0 0.0
  %1300 = vmatpush1.msra.mxu0 0.0
  %1301 = vmatprep.subr.mxu0 0.0
  %1302 = vmatpush1.msra.mxu0 0.0
  %1303 = vmatprep.subr.mxu0 0.0
  %1304 = vmatpush1.msra.mxu0 0.0
  %1305 = vmatprep.subr.mxu0 0.0
  %1306 = vmatpush1.msra.mxu0 0.0
  %1307 = vmatprep.subr.mxu0 0.0
  %1308 = vmatpush1.msra.mxu0 0.0
  %1309 = vmatprep.subr.mxu0 0.0
  %1310 = vmatpush1.msra.mxu0 0.0
  %1311 = vmatprep.subr.mxu0 0.0
  %1312 = vmatpush1.msra.mxu0 0.0
  %1313 = vmatprep.subr.mxu0 0.0
  %1314 = vmatpush1.msra.mxu0 0.0
  %1315 = vmatprep.subr.mxu0 0.0
  %1316 = vmatpush1.msra.mxu0 0.0
  %1317 = vmatprep.subr.mxu0 0.0
  %1318 = vmatpush1.msra.mxu0 0.0
  %1319 = vmatprep.subr.mxu0 0.0
  %1320 = vmatpush1.msra.mxu0 0.0
  %1321 = vmatprep.subr.mxu0 0.0
  %1322 = vmatpush1.msra.mxu0 0.0
  %1323 = vmatprep.subr.mxu0 0.0
  %1324 = vmatpush1.msra.mxu0 0.0
  %1325 = vmatprep.subr.mxu0 0.0
  %1326 = vmatpush1.msra.mxu0 0.0
  %1327 = vmatprep.subr.mxu0 0.0
  %1328 = vmatpush1.msra.mxu0 0.0
  %1329 = vmatprep.subr.mxu0 0.0
  %1330 = vmatpush1.msra.mxu0 0.0
  %1331 = vmatprep.subr.mxu0 0.0
  %1332 = vmatpush1.msra.mxu0 0.0
  %1333 = vmatprep.subr.mxu0 0.0
  %1334 = vmatpush1.msra.mxu0 0.0
  %1335 = vmatprep.subr.mxu0 0.0
  %1336 = vmatpush1.msra.mxu0 0.0
  %1337 = vmatprep.subr.mxu0 0.0
  %1338 = vmatpush1.msra.mxu0 0.0
  %1339 = vmatprep.subr.mxu0 0.0
  %1340 = vmatpush1.msra.mxu0 0.0
  %1341 = vmatprep.subr.mxu0 0.0
  %1342 = vmatpush1.msra.mxu0 0.0
  %1343 = vmatprep.subr.mxu0 0.0
  %1344 = vmatpush1.msra.mxu0 0.0
  %1345 = vmatprep.subr.mxu0 0.0
  %1346 = vmatpush1.msra.mxu0 0.0
  %1347 = vmatprep.mubr.f32.mxu0 0.0
  %1348 = vmatmul.mubr.f32.gmra.mrb[0].mxu0 %v1278
  %v1349 = vpop.f32.mrb[0].mxu0
  %v1350 = vadd.f32 0.0, %v1349
  %v1351 = vpop.f32.mrb[0].mxu0
  %1352 = vmatprep.mubr.f32.mxu0 0.0
  %1353 = vmatmul.mubr.f32.gmra.mrb[0].mxu0 %v1281
  %v1354 = vpop.f32.mrb[0].mxu0
  %v1355 = vadd.f32 0.0, %v1354
  %v1356 = vpop.f32.mrb[0].mxu0
  %1357 = vdwg.mxu0
  %v1358 = vadd.f32 %v936, %v1350
  %v1359 = vadd.f32 %v941, %v1355
  %1360 = vrot.lane.b32.xlu0 %v109, 104
  %v1361 = vpop.permute.xlu0 %1360
  %1362 = vrot.lane.b32.xlu0 %v109, 72
  %v1363 = vpop.permute.xlu0 %1362
  %v1364 = vsel %vm120, %v1361, 0
  %v1366 = vsel %vm120, %v1363, 0
  %1368 = vmatprep.subr.mxu0 0.0
  %1369 = vmatpush1.xpose.msra.mxu0 %v1366
  %1370 = vmatprep.subr.mxu0 0.0
  %1371 = vmatpush1.xpose.msra.mxu0 0.0
  %1372 = vmatprep.subr.mxu0 0.0
  %1373 = vmatpush1.xpose.msra.mxu0 0.0
  %1374 = vmatprep.subr.mxu0 0.0
  %1375 = vmatpush1.xpose.msra.mxu0 0.0
  %1376 = vmatprep.subr.mxu0 0.0
  %1377 = vmatpush1.xpose.msra.mxu0 0.0
  %1378 = vmatprep.subr.mxu0 0.0
  %1379 = vmatpush1.xpose.msra.mxu0 0.0
  %1380 = vmatprep.subr.mxu0 0.0
  %1381 = vmatpush1.xpose.msra.mxu0 0.0
  %1382 = vmatprep.subr.mxu0 0.0
  %1383 = vmatpush1.xpose.msra.mxu0 0.0
  %1384 = vmatprep.subr.mxu0 0.0
  %1385 = vmatpush1.xpose.msra.mxu0 0.0
  %1386 = vmatprep.subr.mxu0 0.0
  %1387 = vmatpush1.xpose.msra.mxu0 0.0
  %1388 = vmatprep.subr.mxu0 0.0
  %1389 = vmatpush1.xpose.msra.mxu0 0.0
  %1390 = vmatprep.subr.mxu0 0.0
  %1391 = vmatpush1.xpose.msra.mxu0 0.0
  %1392 = vmatprep.subr.mxu0 0.0
  %1393 = vmatpush1.xpose.msra.mxu0 0.0
  %1394 = vmatprep.subr.mxu0 0.0
  %1395 = vmatpush1.xpose.msra.mxu0 0.0
  %1396 = vmatprep.subr.mxu0 0.0
  %1397 = vmatpush1.xpose.msra.mxu0 0.0
  %1398 = vmatprep.subr.mxu0 0.0
  %1399 = vmatpush1.xpose.msra.mxu0 0.0
  %1400 = vmatprep.subr.mxu0 0.0
  %1401 = vmatpush1.xpose.msra.mxu0 0.0
  %1402 = vmatprep.subr.mxu0 0.0
  %1403 = vmatpush1.xpose.msra.mxu0 0.0
  %1404 = vmatprep.subr.mxu0 0.0
  %1405 = vmatpush1.xpose.msra.mxu0 0.0
  %1406 = vmatprep.subr.mxu0 0.0
  %1407 = vmatpush1.xpose.msra.mxu0 0.0
  %1408 = vmatprep.subr.mxu0 0.0
  %1409 = vmatpush1.xpose.msra.mxu0 0.0
  %1410 = vmatprep.subr.mxu0 0.0
  %1411 = vmatpush1.xpose.msra.mxu0 0.0
  %1412 = vmatprep.subr.mxu0 0.0
  %1413 = vmatpush1.xpose.msra.mxu0 0.0
  %1414 = vmatprep.subr.mxu0 0.0
  %1415 = vmatpush1.xpose.msra.mxu0 0.0
  %1416 = vmatprep.subr.mxu0 0.0
  %1417 = vmatpush1.xpose.msra.mxu0 0.0
  %1418 = vmatprep.subr.mxu0 0.0
  %1419 = vmatpush1.xpose.msra.mxu0 0.0
  %1420 = vmatprep.subr.mxu0 0.0
  %1421 = vmatpush1.xpose.msra.mxu0 0.0
  %1422 = vmatprep.subr.mxu0 0.0
  %1423 = vmatpush1.xpose.msra.mxu0 0.0
  %1424 = vmatprep.subr.mxu0 0.0
  %1425 = vmatpush1.xpose.msra.mxu0 0.0
  %1426 = vmatprep.subr.mxu0 0.0
  %1427 = vmatpush1.xpose.msra.mxu0 0.0
  %1428 = vmatprep.subr.mxu0 0.0
  %1429 = vmatpush1.xpose.msra.mxu0 0.0
  %1430 = vmatprep.subr.mxu0 0.0
  %1431 = vmatpush1.xpose.msra.mxu0 0.0
  %1432 = vmatprep.mubr.f32.mxu0 0.0
  %1433 = vmatmul.mubr.f32.gmra.mrb[0].mxu0 %v1364
  %v1434 = vpop.f32.mrb[0].mxu0
  %v1435 = vadd.f32 0.0, %v1434
  %v1436 = vpop.f32.mrb[0].mxu0
  %1437 = vdwg.mxu0
  %1438 = vrot.lane.b32.xlu0 %v114, 104
  %v1439 = vpop.permute.xlu0 %1438
  %1440 = vrot.lane.b32.xlu0 %v114, 72
  %v1441 = vpop.permute.xlu0 %1440
  %v1442 = vsel %vm120, %v1439, 0
  %v1444 = vsel %vm120, %v1441, 0
  %1446 = vmatprep.subr.mxu0 0.0
  %1447 = vmatpush1.xpose.msra.mxu0 %v1444
  %1448 = vmatprep.subr.mxu0 0.0
  %1449 = vmatpush1.xpose.msra.mxu0 0.0
  %1450 = vmatprep.subr.mxu0 0.0
  %1451 = vmatpush1.xpose.msra.mxu0 0.0
  %1452 = vmatprep.subr.mxu0 0.0
  %1453 = vmatpush1.xpose.msra.mxu0 0.0
  %1454 = vmatprep.subr.mxu0 0.0
  %1455 = vmatpush1.xpose.msra.mxu0 0.0
  %1456 = vmatprep.subr.mxu0 0.0
  %1457 = vmatpush1.xpose.msra.mxu0 0.0
  %1458 = vmatprep.subr.mxu0 0.0
  %1459 = vmatpush1.xpose.msra.mxu0 0.0
  %1460 = vmatprep.subr.mxu0 0.0
  %1461 = vmatpush1.xpose.msra.mxu0 0.0
  %1462 = vmatprep.subr.mxu0 0.0
  %1463 = vmatpush1.xpose.msra.mxu0 0.0
  %1464 = vmatprep.subr.mxu0 0.0
  %1465 = vmatpush1.xpose.msra.mxu0 0.0
  %1466 = vmatprep.subr.mxu0 0.0
  %1467 = vmatpush1.xpose.msra.mxu0 0.0
  %1468 = vmatprep.subr.mxu0 0.0
  %1469 = vmatpush1.xpose.msra.mxu0 0.0
  %1470 = vmatprep.subr.mxu0 0.0
  %1471 = vmatpush1.xpose.msra.mxu0 0.0
  %1472 = vmatprep.subr.mxu0 0.0
  %1473 = vmatpush1.xpose.msra.mxu0 0.0
  %1474 = vmatprep.subr.mxu0 0.0
  %1475 = vmatpush1.xpose.msra.mxu0 0.0
  %1476 = vmatprep.subr.mxu0 0.0
  %1477 = vmatpush1.xpose.msra.mxu0 0.0
  %1478 = vmatprep.subr.mxu0 0.0
  %1479 = vmatpush1.xpose.msra.mxu0 0.0
  %1480 = vmatprep.subr.mxu0 0.0
  %1481 = vmatpush1.xpose.msra.mxu0 0.0
  %1482 = vmatprep.subr.mxu0 0.0
  %1483 = vmatpush1.xpose.msra.mxu0 0.0
  %1484 = vmatprep.subr.mxu0 0.0
  %1485 = vmatpush1.xpose.msra.mxu0 0.0
  %1486 = vmatprep.subr.mxu0 0.0
  %1487 = vmatpush1.xpose.msra.mxu0 0.0
  %1488 = vmatprep.subr.mxu0 0.0
  %1489 = vmatpush1.xpose.msra.mxu0 0.0
  %1490 = vmatprep.subr.mxu0 0.0
  %1491 = vmatpush1.xpose.msra.mxu0 0.0
  %1492 = vmatprep.subr.mxu0 0.0
  %1493 = vmatpush1.xpose.msra.mxu0 0.0
  %1494 = vmatprep.subr.mxu0 0.0
  %1495 = vmatpush1.xpose.msra.mxu0 0.0
  %1496 = vmatprep.subr.mxu0 0.0
  %1497 = vmatpush1.xpose.msra.mxu0 0.0
  %1498 = vmatprep.subr.mxu0 0.0
  %1499 = vmatpush1.xpose.msra.mxu0 0.0
  %1500 = vmatprep.subr.mxu0 0.0
  %1501 = vmatpush1.xpose.msra.mxu0 0.0
  %1502 = vmatprep.subr.mxu0 0.0
  %1503 = vmatpush1.xpose.msra.mxu0 0.0
  %1504 = vmatprep.subr.mxu0 0.0
  %1505 = vmatpush1.xpose.msra.mxu0 0.0
  %1506 = vmatprep.subr.mxu0 0.0
  %1507 = vmatpush1.xpose.msra.mxu0 0.0
  %1508 = vmatprep.subr.mxu0 0.0
  %1509 = vmatpush1.xpose.msra.mxu0 0.0
  %1510 = vmatprep.mubr.f32.mxu0 0.0
  %1511 = vmatmul.mubr.f32.gmra.mrb[0].mxu0 %v1442
  %v1512 = vpop.f32.mrb[0].mxu0
  %v1513 = vadd.f32 0.0, %v1512
  %v1514 = vpop.f32.mrb[0].mxu0
  %1515 = vdwg.mxu0
  %v1516 = vmul.f32 %v1435, 0.35355338
  %v1517 = vmul.f32 %v1513, 0.35355338
  %v1518 = vsel %vm120, %v1516, -inf
  %1519 = vmax.xlane.f32.xlu0 %v1518
  %v1520 = vpop.xlane.xlu0 %1519
  %v1521 = vsel %vm120, %v1517, -inf
  %1522 = vmax.xlane.f32.xlu0 %v1521
  %v1523 = vpop.xlane.xlu0 %1522
  %v1524 = vsub.f32 %v1516, %v1520
  %v1525 = vsub.f32 %v1517, %v1523
  %v1526 = vmul.f32 %v1524, 1.442695
  %v1527 = vpow.pop %v1526
  %v1528 = vmul.f32 %v1525, 1.442695
  %v1529 = vpow.pop %v1528
  %v1530 = vsel %vm120, %v1527, 0.0
  %1531 = vadd.xlane.f32.xlu0 %v1530
  %v1532 = vpop.xlane.xlu0 %1531
  %v1533 = vsel %vm120, %v1529, 0.0
  %1534 = vadd.xlane.f32.xlu0 %v1533
  %v1535 = vpop.xlane.xlu0 %1534
  %v1536 = vrcp.pop %v1532
  %v1537 = vrcp.pop %v1535
  %v1538 = vmul.f32 %v1527, %v1536
  %v1539 = vmul.f32 %v1529, %v1537
  %1540 = vrot.lane.b32.xlu0 %v109, 40
  %v1541 = vpop.permute.xlu0 %1540
  %v1544 = vsel %vm120, %v1538, 0
  %1546 = vmatprep.subr.mxu0 0.0
  %1547 = vmatpush1.msra.mxu0 %v1541
  %1548 = vmatprep.subr.mxu0 0.0
  %1549 = vmatpush1.msra.mxu0 0.0
  %1550 = vmatprep.subr.mxu0 0.0
  %1551 = vmatpush1.msra.mxu0 0.0
  %1552 = vmatprep.subr.mxu0 0.0
  %1553 = vmatpush1.msra.mxu0 0.0
  %1554 = vmatprep.subr.mxu0 0.0
  %1555 = vmatpush1.msra.mxu0 0.0
  %1556 = vmatprep.subr.mxu0 0.0
  %1557 = vmatpush1.msra.mxu0 0.0
  %1558 = vmatprep.subr.mxu0 0.0
  %1559 = vmatpush1.msra.mxu0 0.0
  %1560 = vmatprep.subr.mxu0 0.0
  %1561 = vmatpush1.msra.mxu0 0.0
  %1562 = vmatprep.subr.mxu0 0.0
  %1563 = vmatpush1.msra.mxu0 0.0
  %1564 = vmatprep.subr.mxu0 0.0
  %1565 = vmatpush1.msra.mxu0 0.0
  %1566 = vmatprep.subr.mxu0 0.0
  %1567 = vmatpush1.msra.mxu0 0.0
  %1568 = vmatprep.subr.mxu0 0.0
  %1569 = vmatpush1.msra.mxu0 0.0
  %1570 = vmatprep.subr.mxu0 0.0
  %1571 = vmatpush1.msra.mxu0 0.0
  %1572 = vmatprep.subr.mxu0 0.0
  %1573 = vmatpush1.msra.mxu0 0.0
  %1574 = vmatprep.subr.mxu0 0.0
  %1575 = vmatpush1.msra.mxu0 0.0
  %1576 = vmatprep.subr.mxu0 0.0
  %1577 = vmatpush1.msra.mxu0 0.0
  %1578 = vmatprep.subr.mxu0 0.0
  %1579 = vmatpush1.msra.mxu0 0.0
  %1580 = vmatprep.subr.mxu0 0.0
  %1581 = vmatpush1.msra.mxu0 0.0
  %1582 = vmatprep.subr.mxu0 0.0
  %1583 = vmatpush1.msra.mxu0 0.0
  %1584 = vmatprep.subr.mxu0 0.0
  %1585 = vmatpush1.msra.mxu0 0.0
  %1586 = vmatprep.subr.mxu0 0.0
  %1587 = vmatpush1.msra.mxu0 0.0
  %1588 = vmatprep.subr.mxu0 0.0
  %1589 = vmatpush1.msra.mxu0 0.0
  %1590 = vmatprep.subr.mxu0 0.0
  %1591 = vmatpush1.msra.mxu0 0.0
  %1592 = vmatprep.subr.mxu0 0.0
  %1593 = vmatpush1.msra.mxu0 0.0
  %1594 = vmatprep.subr.mxu0 0.0
  %1595 = vmatpush1.msra.mxu0 0.0
  %1596 = vmatprep.subr.mxu0 0.0
  %1597 = vmatpush1.msra.mxu0 0.0
  %1598 = vmatprep.subr.mxu0 0.0
  %1599 = vmatpush1.msra.mxu0 0.0
  %1600 = vmatprep.subr.mxu0 0.0
  %1601 = vmatpush1.msra.mxu0 0.0
  %1602 = vmatprep.subr.mxu0 0.0
  %1603 = vmatpush1.msra.mxu0 0.0
  %1604 = vmatprep.subr.mxu0 0.0
  %1605 = vmatpush1.msra.mxu0 0.0
  %1606 = vmatprep.subr.mxu0 0.0
  %1607 = vmatpush1.msra.mxu0 0.0
  %1608 = vmatprep.subr.mxu0 0.0
  %1609 = vmatpush1.msra.mxu0 0.0
  %1610 = vmatprep.mubr.f32.mxu0 0.0
  %1611 = vmatmul.mubr.f32.gmra.mrb[0].mxu0 %v1544
  %v1612 = vpop.f32.mrb[0].mxu0
  %v1613 = vadd.f32 0.0, %v1612
  %v1614 = vpop.f32.mrb[0].mxu0
  %1615 = vdwg.mxu0
  %1616 = vrot.lane.b32.xlu0 %v114, 40
  %v1617 = vpop.permute.xlu0 %1616
  %v1620 = vsel %vm120, %v1539, 0
  %1622 = vmatprep.subr.mxu0 0.0
  %1623 = vmatpush1.msra.mxu0 %v1617
  %1624 = vmatprep.subr.mxu0 0.0
  %1625 = vmatpush1.msra.mxu0 0.0
  %1626 = vmatprep.subr.mxu0 0.0
  %1627 = vmatpush1.msra.mxu0 0.0
  %1628 = vmatprep.subr.mxu0 0.0
  %1629 = vmatpush1.msra.mxu0 0.0
  %1630 = vmatprep.subr.mxu0 0.0
  %1631 = vmatpush1.msra.mxu0 0.0
  %1632 = vmatprep.subr.mxu0 0.0
  %1633 = vmatpush1.msra.mxu0 0.0
  %1634 = vmatprep.subr.mxu0 0.0
  %1635 = vmatpush1.msra.mxu0 0.0
  %1636 = vmatprep.subr.mxu0 0.0
  %1637 = vmatpush1.msra.mxu0 0.0
  %1638 = vmatprep.subr.mxu0 0.0
  %1639 = vmatpush1.msra.mxu0 0.0
  %1640 = vmatprep.subr.mxu0 0.0
  %1641 = vmatpush1.msra.mxu0 0.0
  %1642 = vmatprep.subr.mxu0 0.0
  %1643 = vmatpush1.msra.mxu0 0.0
  %1644 = vmatprep.subr.mxu0 0.0
  %1645 = vmatpush1.msra.mxu0 0.0
  %1646 = vmatprep.subr.mxu0 0.0
  %1647 = vmatpush1.msra.mxu0 0.0
  %1648 = vmatprep.subr.mxu0 0.0
  %1649 = vmatpush1.msra.mxu0 0.0
  %1650 = vmatprep.subr.mxu0 0.0
  %1651 = vmatpush1.msra.mxu0 0.0
  %1652 = vmatprep.subr.mxu0 0.0
  %1653 = vmatpush1.msra.mxu0 0.0
  %1654 = vmatprep.subr.mxu0 0.0
  %1655 = vmatpush1.msra.mxu0 0.0
  %1656 = vmatprep.subr.mxu0 0.0
  %1657 = vmatpush1.msra.mxu0 0.0
  %1658 = vmatprep.subr.mxu0 0.0
  %1659 = vmatpush1.msra.mxu0 0.0
  %1660 = vmatprep.subr.mxu0 0.0
  %1661 = vmatpush1.msra.mxu0 0.0
  %1662 = vmatprep.subr.mxu0 0.0
  %1663 = vmatpush1.msra.mxu0 0.0
  %1664 = vmatprep.subr.mxu0 0.0
  %1665 = vmatpush1.msra.mxu0 0.0
  %1666 = vmatprep.subr.mxu0 0.0
  %1667 = vmatpush1.msra.mxu0 0.0
  %1668 = vmatprep.subr.mxu0 0.0
  %1669 = vmatpush1.msra.mxu0 0.0
  %1670 = vmatprep.subr.mxu0 0.0
  %1671 = vmatpush1.msra.mxu0 0.0
  %1672 = vmatprep.subr.mxu0 0.0
  %1673 = vmatpush1.msra.mxu0 0.0
  %1674 = vmatprep.subr.mxu0 0.0
  %1675 = vmatpush1.msra.mxu0 0.0
  %1676 = vmatprep.subr.mxu0 0.0
  %1677 = vmatpush1.msra.mxu0 0.0
  %1678 = vmatprep.subr.mxu0 0.0
  %1679 = vmatpush1.msra.mxu0 0.0
  %1680 = vmatprep.subr.mxu0 0.0
  %1681 = vmatpush1.msra.mxu0 0.0
  %1682 = vmatprep.subr.mxu0 0.0
  %1683 = vmatpush1.msra.mxu0 0.0
  %1684 = vmatprep.subr.mxu0 0.0
  %1685 = vmatpush1.msra.mxu0 0.0
  %1686 = vmatprep.mubr.f32.mxu0 0.0
  %1687 = vmatmul.mubr.f32.gmra.mrb[0].mxu0 %v1620
  %v1688 = vpop.f32.mrb[0].mxu0
  %v1689 = vadd.f32 0.0, %v1688
  %v1690 = vpop.f32.mrb[0].mxu0
  %1691 = vdwg.mxu0
  %v1692 = vld [vmem:[%s3 + $0x18] sm:$0xff]
  %v1694 = vsel %vm120, %v1613, 0
  %v1697 = vsel %vm120, %v1689, 0
  %1699 = vmatprep.subr.mxu0 0.0
  %1700 = vmatpush1.msra.mxu0 %v1692
  %1701 = vmatprep.subr.mxu0 0.0
  %1702 = vmatpush1.msra.mxu0 0.0
  %1703 = vmatprep.subr.mxu0 0.0
  %1704 = vmatpush1.msra.mxu0 0.0
  %1705 = vmatprep.subr.mxu0 0.0
  %1706 = vmatpush1.msra.mxu0 0.0
  %1707 = vmatprep.subr.mxu0 0.0
  %1708 = vmatpush1.msra.mxu0 0.0
  %1709 = vmatprep.subr.mxu0 0.0
  %1710 = vmatpush1.msra.mxu0 0.0
  %1711 = vmatprep.subr.mxu0 0.0
  %1712 = vmatpush1.msra.mxu0 0.0
  %1713 = vmatprep.subr.mxu0 0.0
  %1714 = vmatpush1.msra.mxu0 0.0
  %1715 = vmatprep.subr.mxu0 0.0
  %1716 = vmatpush1.msra.mxu0 0.0
  %1717 = vmatprep.subr.mxu0 0.0
  %1718 = vmatpush1.msra.mxu0 0.0
  %1719 = vmatprep.subr.mxu0 0.0
  %1720 = vmatpush1.msra.mxu0 0.0
  %1721 = vmatprep.subr.mxu0 0.0
  %1722 = vmatpush1.msra.mxu0 0.0
  %1723 = vmatprep.subr.mxu0 0.0
  %1724 = vmatpush1.msra.mxu0 0.0
  %1725 = vmatprep.subr.mxu0 0.0
  %1726 = vmatpush1.msra.mxu0 0.0
  %1727 = vmatprep.subr.mxu0 0.0
  %1728 = vmatpush1.msra.mxu0 0.0
  %1729 = vmatprep.subr.mxu0 0.0
  %1730 = vmatpush1.msra.mxu0 0.0
  %1731 = vmatprep.subr.mxu0 0.0
  %1732 = vmatpush1.msra.mxu0 0.0
  %1733 = vmatprep.subr.mxu0 0.0
  %1734 = vmatpush1.msra.mxu0 0.0
  %1735 = vmatprep.subr.mxu0 0.0
  %1736 = vmatpush1.msra.mxu0 0.0
  %1737 = vmatprep.subr.mxu0 0.0
  %1738 = vmatpush1.msra.mxu0 0.0
  %1739 = vmatprep.subr.mxu0 0.0
  %1740 = vmatpush1.msra.mxu0 0.0
  %1741 = vmatprep.subr.mxu0 0.0
  %1742 = vmatpush1.msra.mxu0 0.0
  %1743 = vmatprep.subr.mxu0 0.0
  %1744 = vmatpush1.msra.mxu0 0.0
  %1745 = vmatprep.subr.mxu0 0.0
  %1746 = vmatpush1.msra.mxu0 0.0
  %1747 = vmatprep.subr.mxu0 0.0
  %1748 = vmatpush1.msra.mxu0 0.0
  %1749 = vmatprep.subr.mxu0 0.0
  %1750 = vmatpush1.msra.mxu0 0.0
  %1751 = vmatprep.subr.mxu0 0.0
  %1752 = vmatpush1.msra.mxu0 0.0
  %1753 = vmatprep.subr.mxu0 0.0
  %1754 = vmatpush1.msra.mxu0 0.0
  %1755 = vmatprep.subr.mxu0 0.0
  %1756 = vmatpush1.msra.mxu0 0.0
  %1757 = vmatprep.subr.mxu0 0.0
  %1758 = vmatpush1.msra.mxu0 0.0
  %1759 = vmatprep.subr.mxu0 0.0
  %1760 = vmatpush1.msra.mxu0 0.0
  %1761 = vmatprep.subr.mxu0 0.0
  %1762 = vmatpush1.msra.mxu0 0.0
  %1763 = vmatprep.mubr.f32.mxu0 0.0
  %1764 = vmatmul.mubr.f32.gmra.mrb[0].mxu0 %v1694
  %v1765 = vpop.f32.mrb[0].mxu0
  %v1766 = vadd.f32 0.0, %v1765
  %v1767 = vpop.f32.mrb[0].mxu0
  %1768 = vmatprep.mubr.f32.mxu0 0.0
  %1769 = vmatmul.mubr.f32.gmra.mrb[0].mxu0 %v1697
  %v1770 = vpop.f32.mrb[0].mxu0
  %v1771 = vadd.f32 0.0, %v1770
  %v1772 = vpop.f32.mrb[0].mxu0
  %1773 = vdwg.mxu0
  %v1774 = vadd.f32 %v1358, %v1766
  %v1775 = vadd.f32 %v1359, %v1771
  %v1776 = vld [vmem:[%s4] sm:$0x1]
  %v1778 = vlaneseq
  %v1779 = vshrl.u32 %v1778, 7
  %v1780 = vsub.s32 0, %v1779
  %v1781 = vrot.slane %v1776, %v1780
  %v1783 = vadd.f32 %v1774, %v1781
  %v1784 = vadd.f32 %v1775, %v1781
  %1785 = vst [vmem:[%s5] sm:$0xff] %v1783
  %1786 = vst [vmem:[%s5 + $0x8] sm:$0xff] %v1784
  %1787 = vrot.lane.b32.xlu0 %v627, 8
  %v1788 = vpop.permute.xlu0 %1787
  %1789 = vrot.lane.b32.xlu0 %v628, 8
  %v1790 = vpop.permute.xlu0 %1789
  %1793 = vrot.lane.b32.xlu0 %v1122, 16
  %v1794 = vpop.permute.xlu0 %1793
  %1795 = vrot.lane.b32.xlu0 %v1123, 16
  %v1796 = vpop.permute.xlu0 %1795
  %1799 = vrot.lane.b32.xlu0 %v1538, 24
  %v1800 = vpop.permute.xlu0 %1799
  %1801 = vrot.lane.b32.xlu0 %v1539, 24
  %v1802 = vpop.permute.xlu0 %1801
  %v1805 = vsel %vm120, %v294, %v1788
  %v1806 = vsel %vm120, %v295, %v1790
  %vm1807 = vcmask 130048
  %v1808 = vsel %vm1807, %v1805, %v1794
  %v1809 = vsel %vm1807, %v1806, %v1796
  %vm1810 = vcmask 195584
  %v1811 = vsel %vm1810, %v1808, %v1800
  %v1812 = vsel %vm1810, %v1809, %v1802
  %v1813 = vsel %vm35, %v1811, 0.0
  %v1814 = vsel %vm35, %v1812, 0.0
  %1815 = vst [vmem:[%s6] sm:$0xff] %v1813
  %1816 = vst [vmem:[%s6 + $0x8] sm:$0xff] %v1814
  // Predicated region
  $region22: #{siglip_attention.1} parent=0 // pred_check
    _
  $region23: #{siglip_attention.1} parent=0 // pred_check_branch
    %1818 = sbr.rel (0) target = $region25
  $region24: #{siglip_attention.1} parent=0 // pred_region
    _
  $region25: #{siglip_attention.1} parent=0 // pred_fallthru
    _
  // Predicated region
  $region26: #{siglip_attention.1} parent=0 // pred_check
    _
  $region27: #{siglip_attention.1} parent=0 // pred_check_branch
    %1820 = sbr.rel (0) target = $region29
  $region28: #{siglip_attention.1} parent=0 // pred_region
    _
  $region29: #{siglip_attention.1} parent=0 // pred_fallthru
    _
  // Predicated region
  $region30: #{siglip_attention.1} parent=0 // pred_check
    _
  $region31: #{siglip_attention.1} parent=0 // pred_check_branch
    %1822 = sbr.rel (0) target = $region33
  $region32: #{siglip_attention.1} parent=0 // pred_region
    _
  $region33: #{siglip_attention.1} parent=0 // pred_fallthru
    _
  // Predicated region
  $region34: #{siglip_attention.1} parent=0 // pred_check
    _
  $region35: #{siglip_attention.1} parent=0 // pred_check_branch
    %1824 = sbr.rel (0) target = $region37
  $region36: #{siglip_attention.1} parent=0 // pred_region
    _
  $region37: #{siglip_attention.1} parent=0 // pred_fallthru
    _

</llo_original>
